<compile_context>
chip_gen: v6e
topology: v6e:2x2x1
jax: 0.10.0
libtpu: 0.0.40
codegen_flags: <defaults>
</compile_context>

<pallas_src>
import jax
import jax.numpy as jnp
import numpy as np
from jax.experimental import pallas as pl
from jax.experimental.pallas import tpu as pltpu

F_PAD = 128    # lane-dense feature width (all feature dims zero-padded to 128)
N_LANE = 128   # node-count padding granularity (MXU contraction depth / lane width)


# ----------------------------- Pallas kernel ---------------------------------

def fused_rgcn_kernel(x_ref, wp_ref, bp_ref, adj_ref, w_ref, b_ref, o_ref, agg_ref):
    """One grid step == one RelGraphConv layer (the layer axis is the grid).

    x_ref   : (Np, F_PAD)          f32   input features (zero-padded rows/lanes)
    wp_ref  : (F_PAD, F_PAD)       f32   projection weight (zero-padded)
    bp_ref  : (1, F_PAD)           f32   projection bias
    adj_ref : (1, R, Np, Np)       bf16  this layer's per-relation dense adjacency (0/1, exact)
    w_ref   : (1, R*F_PAD, F_PAD)  f32   this layer's relation weights, vstacked over r
    b_ref   : (1, 1, F_PAD)        f32   this layer's h_bias
    o_ref   : (Np, F_PAD)          f32   h; same block every step -> VMEM-resident carry/output
    agg_ref : (Np, R*F_PAD)        f32   scratch: lane-concatenated normalized aggregates
    """
    R = adj_ref.shape[1]
    Fp = o_ref.shape[1]

    # Projection (first layer only): h = x @ W_proj + b_proj.  Padded lanes/rows stay exact.
    @pl.when(pl.program_id(0) == 0)
    def _():
        o_ref[...] = (jnp.dot(x_ref[...], wp_ref[...],
                              preferred_element_type=jnp.float32) + bp_ref[...])

    h = o_ref[...]                                                   # (Np, F_PAD)

    # Per-relation aggregation; adjacency is exact in bf16 (0/1), upcast keeps f32 accuracy.
    # TODO(synk): feeding h as bf16 (native-bf16 MXU pass, ~3x fewer pushes on v6e/v7x) trades
    #             ~4e-3 relative rounding and would miss the 1e-4 reference check, so f32 is kept.
    for r in range(R):
        a = adj_ref[0, r, :, :].astype(jnp.float32)                  # (Np, Np)
        agg = jnp.dot(a, h, preferred_element_type=jnp.float32)      # (Np, F_PAD)
        # GraphConv norm='right': scale aggregate by 1/clamp(in_degree, 1) per destination.
        deg = jnp.sum(a, axis=1, keepdims=True)                      # (Np, 1)
        inv = 1.0 / jnp.maximum(deg, 1.0)
        # Lane-concat into scratch: relation r occupies lanes [r*F_PAD, (r+1)*F_PAD).
        agg_ref[:, r * Fp:(r + 1) * Fp] = agg * inv

    # HeteroGraphConv 'sum' over relations as ONE deep-K matmul:
    # (Np, R*F_PAD) @ (R*F_PAD, F_PAD); relation accumulation happens inside the MXU.
    out = jnp.dot(agg_ref[...], w_ref[0], preferred_element_type=jnp.float32) + b_ref[0]
    o_ref[...] = jnp.maximum(out, 0.0)                               # ReLU; dropout(p=0) == identity


# ----------------------------- wrapper ----------------------------------------

def _pad2(a, rows, cols):
    return jnp.pad(a, ((0, rows - a.shape[0]), (0, cols - a.shape[1])))


def rgcn_forward(blocks_adj, node_features, params, *, ntype="node"):
    """Fused RGCN forward. blocks_adj: list (one per layer) of (R, N, N) dense 0/1 adjacency stacks."""
    # TODO(synk): only the single-node-type homogeneous relational setting is implemented;
    #             DGL multi-ntype hetero graphs / mini-batch block sampling are out of scope.
    # TODO(synk): a v7x dual-TensorCore 'parallel' row-tile axis is not added: each layer's
    #             aggregation needs the FULL previous-layer h, so row tiling would require an
    #             HBM round-trip of h per layer; single-call layer-sequential design kept.
    x = node_features[ntype]
    N = x.shape[0]
    L = len(blocks_adj)
    R = blocks_adj[0].shape[0]
    f_out_last = params["layers"][-1]["weight"].shape[2]

    n_pad = max(N_LANE, int(pl.cdiv(N, N_LANE)) * N_LANE)   # pad node dim -> full MXU depth / lanes

    x_p = _pad2(x, n_pad, F_PAD)
    wp_p = _pad2(params["proj"][ntype]["w"], F_PAD, F_PAD)
    bp_p = _pad2(params["proj"][ntype]["b"].reshape(1, -1), 1, F_PAD)

    # Adjacency: zero-pad both node dims (exact), store bf16 (exact for 0/1 entries).
    # NOTE: the bf16 transfer assumes 0/1 edge weights; weighted edges would need f32 here.
    adj = jnp.stack(blocks_adj)                                            # (L, R, N, N)
    adj = jnp.pad(adj, ((0, 0), (0, 0), (0, n_pad - N), (0, n_pad - N))).astype(jnp.bfloat16)

    # Relation weights vstacked over r (K-concat form), each zero-padded to (F_PAD, F_PAD).
    w_p = jnp.stack([
        jnp.pad(lp["weight"],
                ((0, 0),
                 (0, F_PAD - lp["weight"].shape[1]),
                 (0, F_PAD - lp["weight"].shape[2]))).reshape(R * F_PAD, F_PAD)
        for lp in params["layers"]])                                       # (L, R*F_PAD, F_PAD)
    b_p = jnp.stack([
        jnp.pad(lp["h_bias"].reshape(1, -1),
                ((0, 0), (0, F_PAD - lp["h_bias"].shape[0])))
        for lp in params["layers"]])                                       # (L, 1, F_PAD)

    flops = (2 * n_pad * F_PAD * F_PAD
             + L * (2 * R * n_pad * n_pad * F_PAD + 2 * n_pad * (R * F_PAD) * F_PAD))
    bytes_accessed = sum(int(np.prod(a.shape)) * a.dtype.itemsize
                         for a in (x_p, wp_p, bp_p, adj, w_p, b_p)) + n_pad * F_PAD * 4

    grid_spec = pltpu.PrefetchScalarGridSpec(
        num_scalar_prefetch=0,
        grid=(L,),
        in_specs=[
            pl.BlockSpec((n_pad, F_PAD), lambda l: (0, 0)),                 # x (used at layer 0)
            pl.BlockSpec((F_PAD, F_PAD), lambda l: (0, 0)),                 # W_proj
            pl.BlockSpec((1, F_PAD), lambda l: (0, 0)),                     # b_proj
            pl.BlockSpec((1, R, n_pad, n_pad), lambda l: (l, 0, 0, 0)),     # adjacency, per layer
            pl.BlockSpec((1, R * F_PAD, F_PAD), lambda l: (l, 0, 0)),       # relation weights
            pl.BlockSpec((1, 1, F_PAD), lambda l: (l, 0, 0)),               # h_bias
        ],
        out_specs=pl.BlockSpec((n_pad, F_PAD), lambda l: (0, 0)),           # h carry (VMEM-resident)
        scratch_shapes=[pltpu.VMEM((n_pad, R * F_PAD), jnp.float32)],
    )

    out = pl.pallas_call(
        fused_rgcn_kernel,
        out_shape=jax.ShapeDtypeStruct((n_pad, F_PAD), jnp.float32),
        grid_spec=grid_spec,
        compiler_params=pltpu.CompilerParams(
            dimension_semantics=("arbitrary",),          # layer axis is a sequential carry
            vmem_limit_bytes=32 * 1024 * 1024),
        cost_estimate=pl.CostEstimate(flops=flops, transcendentals=0,
                                      bytes_accessed=bytes_accessed),
    )(x_p, wp_p, bp_p, adj, w_p, b_p)

    return {ntype: out[:N, :f_out_last]}


# ----------------------------- pure-JAX reference ----------------------------

def ref_rgcn(blocks_adj, node_features, params):
    hp = jax.lax.Precision.HIGHEST
    h = {nt: jnp.dot(node_features[nt], params["proj"][nt]["w"], precision=hp)
             + params["proj"][nt]["b"]
         for nt in node_features}
    for a_stack, lp in zip(blocks_adj, params["layers"]):
        x = h["node"]
        deg = a_stack.sum(axis=2, keepdims=True)
        a_norm = a_stack / jnp.maximum(deg, 1.0)
        out = jnp.einsum("rij,jk,rkl->il", a_norm, x, lp["weight"], precision=hp) + lp["h_bias"]
        h = {"node": jax.nn.relu(out)}
    return h


# ----------------------------- parameter init --------------------------------

def xavier_uniform(key, shape, gain):
    fan_in, fan_out = shape[-2], shape[-1]
    limit = gain * np.sqrt(6.0 / (fan_in + fan_out))
    return jax.random.uniform(key, shape, jnp.float32, -limit, limit)


def init_params(key, input_dim_dict, hidden_sizes, num_etypes):
    gain = np.sqrt(2.0)  # nn.init.calculate_gain('relu')
    params = {"proj": {}, "layers": []}
    for nt, d_in in input_dim_dict.items():
        key, k1, k2 = jax.random.split(key, 3)
        params["proj"][nt] = {
            "w": xavier_uniform(k1, (d_in, hidden_sizes[0]), 1.0),
            "b": jax.random.uniform(k2, (hidden_sizes[0],), jnp.float32, -0.1, 0.1),
        }
    dims = [hidden_sizes[0]] + list(hidden_sizes)
    for li in range(len(hidden_sizes)):
        key, kw = jax.random.split(key)
        params["layers"].append({
            "weight": xavier_uniform(kw, (num_etypes, dims[li], dims[li + 1]), gain),
            "h_bias": jnp.zeros((dims[li + 1],), jnp.float32),  # reset_parameters: zeros_
        })
    return params


# ----------------------------- main -------------------------------------------

if __name__ == "__main__":
    key = jax.random.PRNGKey(0)

    N = 64                      # number of nodes
    R = 3                       # number of edge types (relations)
    input_dim_dict = {"node": 12}
    hidden_sizes = [32, 32]
    # num_bases = 0 -> use_basis False ; use_self_loop = False ; dropout = 0.0

    key, kp, ka0, ka1, kx = jax.random.split(key, 5)
    params = init_params(kp, input_dim_dict, hidden_sizes, R)

    # one dense adjacency stack per layer ("blocks" = full graph per layer)
    adj0 = jax.random.bernoulli(ka0, 0.15, (R, N, N)).astype(jnp.float32)
    adj1 = jax.random.bernoulli(ka1, 0.15, (R, N, N)).astype(jnp.float32)
    blocks_adj = [adj0, adj1]

    node_features = {"node": jax.random.normal(kx, (N, input_dim_dict["node"]), jnp.float32)}

    out = rgcn_forward(blocks_adj, node_features, params)
    out = jax.tree_util.tree_map(jax.block_until_ready, out)

    ref = ref_rgcn(blocks_adj, node_features, params)
    np.testing.assert_allclose(np.asarray(out["node"]), np.asarray(ref["node"]),
                               rtol=1e-4, atol=1e-4)

    print("KERNEL_OK")
</pallas_src>

<mosaic_0001>
module attributes {stable_mosaic.version = 11 : i64} {
  func.func @fused_rgcn_kernel(%arg0: i32, %arg1: memref<128x128xf32, #tpu.memory_space<vmem>>, %arg2: memref<128x128xf32, #tpu.memory_space<vmem>>, %arg3: memref<1x128xf32, #tpu.memory_space<vmem>>, %arg4: memref<1x3x128x128xbf16, #tpu.memory_space<vmem>>, %arg5: memref<1x384x128xf32, #tpu.memory_space<vmem>>, %arg6: memref<1x1x128xf32, #tpu.memory_space<vmem>>, %arg7: memref<128x128xf32, #tpu.memory_space<vmem>>, %arg8: memref<128x384xf32, #tpu.memory_space<vmem>>) attributes {dimension_semantics = [#tpu.dimension_semantics<arbitrary>], iteration_bounds = array<i64: 2>, scalar_prefetch = 0 : i64, scratch_operands = 1 : i64, tpu.core_type = #tpu.core_type<tc>, window_params = [{pipeline_mode = #tpu.pipeline_mode<synchronous>, transform_indices = @transform_0, window_bounds = array<i64: 128, 128>}, {pipeline_mode = #tpu.pipeline_mode<synchronous>, transform_indices = @transform_1, window_bounds = array<i64: 128, 128>}, {pipeline_mode = #tpu.pipeline_mode<synchronous>, transform_indices = @transform_2, window_bounds = array<i64: 1, 128>}, {transform_indices = @transform_3, window_bounds = array<i64: 1, 3, 128, 128>}, {transform_indices = @transform_4, window_bounds = array<i64: 1, 384, 128>}, {transform_indices = @transform_5, window_bounds = array<i64: 1, 1, 128>}, {pipeline_mode = #tpu.pipeline_mode<synchronous>, transform_indices = @transform_6, window_bounds = array<i64: 128, 128>}]} {
    %c0_i32 = arith.constant 0 : i32
    %0 = arith.cmpi eq, %arg0, %c0_i32 : i32
    %1 = arith.extui %0 : i1 to i32
    %c0_i32_0 = arith.constant 0 : i32
    %2 = arith.cmpi ne, %1, %c0_i32_0 : i32
    scf.if %2 {
      %c0_39 = arith.constant 0 : index
      %c0_40 = arith.constant 0 : index
      %54 = vector.load %arg1[%c0_39, %c0_40] : memref<128x128xf32, #tpu.memory_space<vmem>>, vector<128x128xf32>
      %c0_41 = arith.constant 0 : index
      %c0_42 = arith.constant 0 : index
      %55 = vector.load %arg2[%c0_41, %c0_42] : memref<128x128xf32, #tpu.memory_space<vmem>>, vector<128x128xf32>
      %cst_43 = arith.constant dense<0.000000e+00> : vector<128x128xf32>
      %56 = tpu.matmul %54, %55, %cst_43 {dimension_numbers = #tpu.dot_dimension_numbers<[1], [0], [0], [1], [0, 0, 1, 1], [], []>} : vector<128x128xf32>, vector<128x128xf32>, vector<128x128xf32> -> vector<128x128xf32>
      %c0_44 = arith.constant 0 : index
      %c0_45 = arith.constant 0 : index
      %57 = vector.load %arg3[%c0_44, %c0_45] : memref<1x128xf32, #tpu.memory_space<vmem>>, vector<1x128xf32>
      %58 = vector.broadcast %57 : vector<1x128xf32> to vector<128x128xf32>
      %59 = arith.addf %56, %58 : vector<128x128xf32>
      %c0_46 = arith.constant 0 : index
      %c0_47 = arith.constant 0 : index
      %60 = vector.load %arg7[%c0_46, %c0_47] : memref<128x128xf32, #tpu.memory_space<vmem>>, vector<128x128xf32>
      tpu.vector_store %arg7[%c0_46, %c0_47], %59 {strides = array<i32>} : memref<128x128xf32, #tpu.memory_space<vmem>>, vector<128x128xf32>,
    } else {
    }
    %c0 = arith.constant 0 : index
    %c0_1 = arith.constant 0 : index
    %3 = vector.load %arg7[%c0, %c0_1] : memref<128x128xf32, #tpu.memory_space<vmem>>, vector<128x128xf32>
    %c0_2 = arith.constant 0 : index
    %c0_3 = arith.constant 0 : index
    %c0_4 = arith.constant 0 : index
    %c0_5 = arith.constant 0 : index
    %4 = vector.load %arg4[%c0_2, %c0_3, %c0_4, %c0_5] : memref<1x3x128x128xbf16, #tpu.memory_space<vmem>>, vector<1x1x128x128xbf16>
    %5 = vector.shape_cast %4 : vector<1x1x128x128xbf16> to vector<128x128xbf16>
    %6 = arith.extf %5 : vector<128x128xbf16> to vector<128x128xf32>
    %cst = arith.constant dense<0.000000e+00> : vector<128x128xf32>
    %7 = tpu.matmul %6, %3, %cst {dimension_numbers = #tpu.dot_dimension_numbers<[1], [0], [0], [1], [0, 0, 1, 1], [], []>} : vector<128x128xf32>, vector<128x128xf32>, vector<128x128xf32> -> vector<128x128xf32>
    %cst_6 = arith.constant dense<0.000000e+00> : vector<128xf32>
    %8 = vector.multi_reduction <add>, %6, %cst_6 [1] : vector<128x128xf32> to vector<128xf32>
    %9 = vector.shape_cast %8 : vector<128xf32> to vector<128x1xf32>
    %cst_7 = arith.constant 1.000000e+00 : f32
    %10 = vector.broadcast %cst_7 : f32 to vector<128x1xf32>
    %11 = arith.maximumf %9, %10 : vector<128x1xf32>
    %cst_8 = arith.constant 1.000000e+00 : f32
    %12 = vector.broadcast %cst_8 : f32 to vector<128x1xf32>
    %13 = arith.divf %12, %11 : vector<128x1xf32>
    %14 = vector.broadcast %13 : vector<128x1xf32> to vector<128x128xf32>
    %15 = arith.mulf %7, %14 : vector<128x128xf32>
    %c0_9 = arith.constant 0 : index
    %c0_10 = arith.constant 0 : index
    %16 = vector.load %arg8[%c0_9, %c0_10] : memref<128x384xf32, #tpu.memory_space<vmem>>, vector<128x128xf32>
    tpu.vector_store %arg8[%c0_9, %c0_10], %15 {strides = array<i32>} : memref<128x384xf32, #tpu.memory_space<vmem>>, vector<128x128xf32>,
    %c0_11 = arith.constant 0 : index
    %c1 = arith.constant 1 : index
    %c0_12 = arith.constant 0 : index
    %c0_13 = arith.constant 0 : index
    %17 = vector.load %arg4[%c0_11, %c1, %c0_12, %c0_13] : memref<1x3x128x128xbf16, #tpu.memory_space<vmem>>, vector<1x1x128x128xbf16>
    %18 = vector.shape_cast %17 : vector<1x1x128x128xbf16> to vector<128x128xbf16>
    %19 = arith.extf %18 : vector<128x128xbf16> to vector<128x128xf32>
    %cst_14 = arith.constant dense<0.000000e+00> : vector<128x128xf32>
    %20 = tpu.matmul %19, %3, %cst_14 {dimension_numbers = #tpu.dot_dimension_numbers<[1], [0], [0], [1], [0, 0, 1, 1], [], []>} : vector<128x128xf32>, vector<128x128xf32>, vector<128x128xf32> -> vector<128x128xf32>
    %cst_15 = arith.constant dense<0.000000e+00> : vector<128xf32>
    %21 = vector.multi_reduction <add>, %19, %cst_15 [1] : vector<128x128xf32> to vector<128xf32>
    %22 = vector.shape_cast %21 : vector<128xf32> to vector<128x1xf32>
    %cst_16 = arith.constant 1.000000e+00 : f32
    %23 = vector.broadcast %cst_16 : f32 to vector<128x1xf32>
    %24 = arith.maximumf %22, %23 : vector<128x1xf32>
    %cst_17 = arith.constant 1.000000e+00 : f32
    %25 = vector.broadcast %cst_17 : f32 to vector<128x1xf32>
    %26 = arith.divf %25, %24 : vector<128x1xf32>
    %27 = vector.broadcast %26 : vector<128x1xf32> to vector<128x128xf32>
    %28 = arith.mulf %20, %27 : vector<128x128xf32>
    %c0_18 = arith.constant 0 : index
    %c128 = arith.constant 128 : index
    %29 = vector.load %arg8[%c0_18, %c128] : memref<128x384xf32, #tpu.memory_space<vmem>>, vector<128x128xf32>
    tpu.vector_store %arg8[%c0_18, %c128], %28 {strides = array<i32>} : memref<128x384xf32, #tpu.memory_space<vmem>>, vector<128x128xf32>,
    %c0_19 = arith.constant 0 : index
    %c2 = arith.constant 2 : index
    %c0_20 = arith.constant 0 : index
    %c0_21 = arith.constant 0 : index
    %30 = vector.load %arg4[%c0_19, %c2, %c0_20, %c0_21] : memref<1x3x128x128xbf16, #tpu.memory_space<vmem>>, vector<1x1x128x128xbf16>
    %31 = vector.shape_cast %30 : vector<1x1x128x128xbf16> to vector<128x128xbf16>
    %32 = arith.extf %31 : vector<128x128xbf16> to vector<128x128xf32>
    %cst_22 = arith.constant dense<0.000000e+00> : vector<128x128xf32>
    %33 = tpu.matmul %32, %3, %cst_22 {dimension_numbers = #tpu.dot_dimension_numbers<[1], [0], [0], [1], [0, 0, 1, 1], [], []>} : vector<128x128xf32>, vector<128x128xf32>, vector<128x128xf32> -> vector<128x128xf32>
    %cst_23 = arith.constant dense<0.000000e+00> : vector<128xf32>
    %34 = vector.multi_reduction <add>, %32, %cst_23 [1] : vector<128x128xf32> to vector<128xf32>
    %35 = vector.shape_cast %34 : vector<128xf32> to vector<128x1xf32>
    %cst_24 = arith.constant 1.000000e+00 : f32
    %36 = vector.broadcast %cst_24 : f32 to vector<128x1xf32>
    %37 = arith.maximumf %35, %36 : vector<128x1xf32>
    %cst_25 = arith.constant 1.000000e+00 : f32
    %38 = vector.broadcast %cst_25 : f32 to vector<128x1xf32>
    %39 = arith.divf %38, %37 : vector<128x1xf32>
    %40 = vector.broadcast %39 : vector<128x1xf32> to vector<128x128xf32>
    %41 = arith.mulf %33, %40 : vector<128x128xf32>
    %c0_26 = arith.constant 0 : index
    %c256 = arith.constant 256 : index
    %42 = vector.load %arg8[%c0_26, %c256] : memref<128x384xf32, #tpu.memory_space<vmem>>, vector<128x128xf32>
    tpu.vector_store %arg8[%c0_26, %c256], %41 {strides = array<i32>} : memref<128x384xf32, #tpu.memory_space<vmem>>, vector<128x128xf32>,
    %c0_27 = arith.constant 0 : index
    %c0_28 = arith.constant 0 : index
    %43 = vector.load %arg8[%c0_27, %c0_28] : memref<128x384xf32, #tpu.memory_space<vmem>>, vector<128x384xf32>
    %c0_29 = arith.constant 0 : index
    %c0_30 = arith.constant 0 : index
    %c0_31 = arith.constant 0 : index
    %44 = vector.load %arg5[%c0_29, %c0_30, %c0_31] : memref<1x384x128xf32, #tpu.memory_space<vmem>>, vector<1x384x128xf32>
    %45 = vector.shape_cast %44 : vector<1x384x128xf32> to vector<384x128xf32>
    %cst_32 = arith.constant dense<0.000000e+00> : vector<128x128xf32>
    %46 = tpu.matmul %43, %45, %cst_32 {dimension_numbers = #tpu.dot_dimension_numbers<[1], [0], [0], [1], [0, 0, 1, 1], [], []>} : vector<128x384xf32>, vector<384x128xf32>, vector<128x128xf32> -> vector<128x128xf32>
    %c0_33 = arith.constant 0 : index
    %c0_34 = arith.constant 0 : index
    %c0_35 = arith.constant 0 : index
    %47 = vector.load %arg6[%c0_33, %c0_34, %c0_35] : memref<1x1x128xf32, #tpu.memory_space<vmem>>, vector<1x1x128xf32>
    %48 = vector.shape_cast %47 : vector<1x1x128xf32> to vector<1x128xf32>
    %49 = vector.broadcast %48 : vector<1x128xf32> to vector<128x128xf32>
    %50 = arith.addf %46, %49 : vector<128x128xf32>
    %cst_36 = arith.constant 0.000000e+00 : f32
    %51 = vector.broadcast %cst_36 : f32 to vector<128x128xf32>
    %52 = arith.maximumf %50, %51 : vector<128x128xf32>
    %c0_37 = arith.constant 0 : index
    %c0_38 = arith.constant 0 : index
    %53 = vector.load %arg7[%c0_37, %c0_38] : memref<128x128xf32, #tpu.memory_space<vmem>>, vector<128x128xf32>
    tpu.vector_store %arg7[%c0_37, %c0_38], %52 {strides = array<i32>} : memref<128x128xf32, #tpu.memory_space<vmem>>, vector<128x128xf32>,
    return
  }
  func.func @transform_0(%arg0: i32) -> (i32, i32) {
    %c0_i32 = arith.constant 0 : i32
    %c0_i32_0 = arith.constant 0 : i32
    %c0_i32_1 = arith.constant 0 : i32
    return %c0_i32, %c0_i32_0 : i32, i32
  }
  func.func @transform_1(%arg0: i32) -> (i32, i32) {
    %c0_i32 = arith.constant 0 : i32
    %c0_i32_0 = arith.constant 0 : i32
    %c0_i32_1 = arith.constant 0 : i32
    return %c0_i32, %c0_i32_0 : i32, i32
  }
  func.func @transform_2(%arg0: i32) -> (i32, i32) {
    %c0_i32 = arith.constant 0 : i32
    %c0_i32_0 = arith.constant 0 : i32
    %c0_i32_1 = arith.constant 0 : i32
    return %c0_i32, %c0_i32_0 : i32, i32
  }
  func.func @transform_3(%arg0: i32) -> (i32, i32, i32, i32) {
    %c0_i32 = arith.constant 0 : i32
    %c0_i32_0 = arith.constant 0 : i32
    %c0_i32_1 = arith.constant 0 : i32
    %c0_i32_2 = arith.constant 0 : i32
    return %arg0, %c0_i32, %c0_i32_0, %c0_i32_1 : i32, i32, i32, i32
  }
  func.func @transform_4(%arg0: i32) -> (i32, i32, i32) {
    %c0_i32 = arith.constant 0 : i32
    %c0_i32_0 = arith.constant 0 : i32
    %c0_i32_1 = arith.constant 0 : i32
    return %arg0, %c0_i32, %c0_i32_0 : i32, i32, i32
  }
  func.func @transform_5(%arg0: i32) -> (i32, i32, i32) {
    %c0_i32 = arith.constant 0 : i32
    %c0_i32_0 = arith.constant 0 : i32
    %c0_i32_1 = arith.constant 0 : i32
    return %arg0, %c0_i32, %c0_i32_0 : i32, i32, i32
  }
  func.func @transform_6(%arg0: i32) -> (i32, i32) {
    %c0_i32 = arith.constant 0 : i32
    %c0_i32_0 = arith.constant 0 : i32
    %c0_i32_1 = arith.constant 0 : i32
    return %c0_i32, %c0_i32_0 : i32, i32
  }
}

</mosaic_0001>

<llo_original>
// kernel: tpu_custom_call.1
$region0: #{tpu_custom_call.1}
  #allocation0 [shape = 'u32[]', space=smem, size = 0x4, offset = 0x4, fixed_abs, tag = 'smem constant byte address 0x4 - core index']
  #allocation1 [shape = 'u32[144,128]{1,0:T(1,128)}', space=vmem, size = 0x12000, scoped, tag = 'internal scratch']
  #allocation2 [shape = 'f32[128,384]{1,0:T(8,128)}', space=vmem, size = 0x30000, scoped, tag = 'scratch operand']
  %s0 = inlined_call_operand.hbm [shape: f32[128,128], index: 0, kind: input, shape index: {}]
  %s1 = inlined_call_operand.hbm [shape: f32[128,128], index: 1, kind: input, shape index: {}]
  %s2 = inlined_call_operand.vmem [shape: f32[1,128], index: 2, kind: input, shape index: {}]
  %s3 = inlined_call_operand.hbm [shape: bf16[2,3,128,128], index: 3, kind: input, shape index: {}]
  %s4 = inlined_call_operand.hbm [shape: f32[2,384,128], index: 4, kind: input, shape index: {}]
  %s5 = inlined_call_operand.vmem [shape: f32[2,1,128], index: 5, kind: input, shape index: {}]
  %s6 = inlined_call_operand.hbm [shape: f32[128,128], index: 6, kind: output, shape index: {}]
  %s7 = sld [smem:[#allocation0]]
  $region77: #{tpu_custom_call.1} parent=0
    _
  %s9 = ssub.s32 1, %s7
  %s10 = scalar_select 0, %s9, %s7
  $region1: #{tpu_custom_call.1} parent=0
    #allocation3 [shape = 'u8[65536]{0}', space=vmem, size = 0x10000, scoped, tag = 'input window, operand 0, single buffered']
    #allocation4 [shape = 's32[2]{0}', space=sflag, size = 0x8, scoped, tag = 'scoped memory for tpu_custom_call.1']
    #allocation5 [shape = 's32[2]{0}', space=sflag, size = 0x8, scoped, tag = 'scoped memory for tpu_custom_call.1']
    #allocation6 [shape = 'u8[65536]{0}', space=vmem, size = 0x10000, scoped, tag = 'input window, operand 1, single buffered']
    #allocation7 [shape = 's32[1]{0}', space=sflag, size = 0x4, scoped, tag = 'scoped memory for tpu_custom_call.1']
    #allocation8 [shape = 'u8[196608]{0}', space=vmem, size = 0x30000, scoped, tag = 'input window, operand 3']
    #allocation9 [shape = 'u8[393216]{0}', space=vmem, size = 0x60000, scoped, tag = 'input window, operand 4']
    #allocation10 [shape = 'u8[65536]{0}', space=vmem, size = 0x10000, scoped, tag = 'output window, operand 0, single buffered']
    %11 = vsyncpa [#allocation4], 0
    %12 = vsyncpa [#allocation7], 0
    %13 = vsyncpa [#allocation5], 0
    loop: start=0, step=1, limit=4
    $region2: #{tpu_custom_call.1} parent=1 // loop_pre_header
      _
    $region3: #{tpu_custom_call.1} parent=1 // loop_header
      %s15 = sphi 0, %s19
      %p16 = scmp.ge.s32.totalorder %s15, 4
      %s23 = sphi 0, %s23
      %s25 = sphi 0, %s23
      %s26 = sphi 0, %s25
      %s40 = sphi 0, %s26
      %s44 = sphi 0, %s44
      %s46 = sphi 0, %s44
      %s47 = sphi 0, %s46
      %s61 = sphi 0, %s47
      %s65 = sphi 0, %s65
      %s67 = sphi 0, %s65
      %s68 = sphi 0, %s67
      %s82 = sphi 0, %s68
      %s88 = sphi 0, %s90
      %s91 = sphi 0, %s88
      %s92 = sphi 0, %s91
      %s108 = sphi 0, %s92
      %s114 = sphi 0, %s116
      %s117 = sphi 0, %s114
      %s118 = sphi 0, %s117
      %s134 = sphi 0, %s118
      %s140 = sphi 0, %s142
      %s143 = sphi 0, %s140
      %s144 = sphi 0, %s143
      %s160 = sphi 0, %s144
      %s164 = sphi 0, %s164
      %s166 = sphi 0, %s164
      %s167 = sphi 0, %s166
      %s181 = sphi 0, %s167
    $region4: #{tpu_custom_call.1} parent=1 // loop_header_branch
      %18 = sbr.rel (%p16) target = $region8
    $region5: #{tpu_custom_call.1} parent=1 // loop_body
      %s20 = ssub.s32 %s15, 1
      %s21 = ssub.s32 %s15, 2
      %s22 = sadd.s32 %s15, 1
      %s24 = sadd.s32 %s23, 1
      %p27 = scmp.eq.s32.totalorder %s15, 1
      %p28 = scmp.ne.s32.totalorder %s23, %s25
      %p29 = scmp.eq.s32.totalorder %s15, 0
      %p30 = por %p28, %p29
      %p31 = scmp.ne.s32.totalorder %s23, %s25
      %p32 = scmp.eq.s32.totalorder %s20, 1
      %p33 = por %p31, %p32
      %p34 = scmp.ne.s32.totalorder %s25, %s26
      %p35 = scmp.eq.s32.totalorder %s20, 0
      %p36 = por %p34, %p35
      %p37 = scmp.ne.s32.totalorder %s25, %s26
      %p38 = scmp.eq.s32.totalorder %s21, 1
      %p39 = por %p37, %p38
      %p41 = scmp.ne.s32.totalorder %s26, %s40
      %p42 = scmp.eq.s32.totalorder %s21, 0
      %p43 = por %p41, %p42
      %s45 = sadd.s32 %s44, 1
      %p48 = scmp.eq.s32.totalorder %s15, 1
      %p49 = scmp.ne.s32.totalorder %s44, %s46
      %p50 = scmp.eq.s32.totalorder %s15, 0
      %p51 = por %p49, %p50
      %p52 = scmp.ne.s32.totalorder %s44, %s46
      %p53 = scmp.eq.s32.totalorder %s20, 1
      %p54 = por %p52, %p53
      %p55 = scmp.ne.s32.totalorder %s46, %s47
      %p56 = scmp.eq.s32.totalorder %s20, 0
      %p57 = por %p55, %p56
      %p58 = scmp.ne.s32.totalorder %s46, %s47
      %p59 = scmp.eq.s32.totalorder %s21, 1
      %p60 = por %p58, %p59
      %p62 = scmp.ne.s32.totalorder %s47, %s61
      %p63 = scmp.eq.s32.totalorder %s21, 0
      %p64 = por %p62, %p63
      %s66 = sadd.s32 %s65, 1
      %p69 = scmp.eq.s32.totalorder %s15, 1
      %p70 = scmp.ne.s32.totalorder %s65, %s67
      %p71 = scmp.eq.s32.totalorder %s15, 0
      %p72 = por %p70, %p71
      %p73 = scmp.ne.s32.totalorder %s65, %s67
      %p74 = scmp.eq.s32.totalorder %s20, 1
      %p75 = por %p73, %p74
      %p76 = scmp.ne.s32.totalorder %s67, %s68
      %p77 = scmp.eq.s32.totalorder %s20, 0
      %p78 = por %p76, %p77
      %p79 = scmp.ne.s32.totalorder %s67, %s68
      %p80 = scmp.eq.s32.totalorder %s21, 1
      %p81 = por %p79, %p80
      %p83 = scmp.ne.s32.totalorder %s68, %s82
      %p84 = scmp.eq.s32.totalorder %s21, 0
      %p85 = por %p83, %p84
      %s86 = ssub.s32 %s15, %s22
      %p87 = scmp.eq.s32.totalorder %s86, 0
      %s89 = sadd.s32 %s88, 1
      %s90 = scalar_select %p87, %s88, %s89
      %p93 = pneg %p87
      %p94 = scmp.eq.s32.totalorder %s15, 1
      %p95 = por %p93, %p94
      %p96 = scmp.ne.s32.totalorder %s88, %s91
      %p97 = scmp.eq.s32.totalorder %s15, 0
      %p98 = por %p96, %p97
      %p99 = scmp.ne.s32.totalorder %s88, %s91
      %p100 = scmp.eq.s32.totalorder %s20, 1
      %p101 = por %p99, %p100
      %p102 = scmp.ne.s32.totalorder %s91, %s92
      %p103 = scmp.eq.s32.totalorder %s20, 0
      %p104 = por %p102, %p103
      %p105 = scmp.ne.s32.totalorder %s91, %s92
      %p106 = scmp.eq.s32.totalorder %s21, 1
      %p107 = por %p105, %p106
      %p109 = scmp.ne.s32.totalorder %s92, %s108
      %p110 = scmp.eq.s32.totalorder %s21, 0
      %p111 = por %p109, %p110
      %s112 = ssub.s32 %s15, %s22
      %p113 = scmp.eq.s32.totalorder %s112, 0
      %s115 = sadd.s32 %s114, 1
      %s116 = scalar_select %p113, %s114, %s115
      %p119 = pneg %p113
      %p120 = scmp.eq.s32.totalorder %s15, 1
      %p121 = por %p119, %p120
      %p122 = scmp.ne.s32.totalorder %s114, %s117
      %p123 = scmp.eq.s32.totalorder %s15, 0
      %p124 = por %p122, %p123
      %p125 = scmp.ne.s32.totalorder %s114, %s117
      %p126 = scmp.eq.s32.totalorder %s20, 1
      %p127 = por %p125, %p126
      %p128 = scmp.ne.s32.totalorder %s117, %s118
      %p129 = scmp.eq.s32.totalorder %s20, 0
      %p130 = por %p128, %p129
      %p131 = scmp.ne.s32.totalorder %s117, %s118
      %p132 = scmp.eq.s32.totalorder %s21, 1
      %p133 = por %p131, %p132
      %p135 = scmp.ne.s32.totalorder %s118, %s134
      %p136 = scmp.eq.s32.totalorder %s21, 0
      %p137 = por %p135, %p136
      %s138 = ssub.s32 %s15, %s22
      %p139 = scmp.eq.s32.totalorder %s138, 0
      %s141 = sadd.s32 %s140, 1
      %s142 = scalar_select %p139, %s140, %s141
      %p145 = pneg %p139
      %p146 = scmp.eq.s32.totalorder %s15, 1
      %p147 = por %p145, %p146
      %p148 = scmp.ne.s32.totalorder %s140, %s143
      %p149 = scmp.eq.s32.totalorder %s15, 0
      %p150 = por %p148, %p149
      %p151 = scmp.ne.s32.totalorder %s140, %s143
      %p152 = scmp.eq.s32.totalorder %s20, 1
      %p153 = por %p151, %p152
      %p154 = scmp.ne.s32.totalorder %s143, %s144
      %p155 = scmp.eq.s32.totalorder %s20, 0
      %p156 = por %p154, %p155
      %p157 = scmp.ne.s32.totalorder %s143, %s144
      %p158 = scmp.eq.s32.totalorder %s21, 1
      %p159 = por %p157, %p158
      %p161 = scmp.ne.s32.totalorder %s144, %s160
      %p162 = scmp.eq.s32.totalorder %s21, 0
      %p163 = por %p161, %p162
      %s165 = sadd.s32 %s164, 1
      %p168 = scmp.eq.s32.totalorder %s15, 1
      %p169 = scmp.ne.s32.totalorder %s164, %s166
      %p170 = scmp.eq.s32.totalorder %s15, 0
      %p171 = por %p169, %p170
      %p172 = scmp.ne.s32.totalorder %s164, %s166
      %p173 = scmp.eq.s32.totalorder %s20, 1
      %p174 = por %p172, %p173
      %p175 = scmp.ne.s32.totalorder %s166, %s167
      %p176 = scmp.eq.s32.totalorder %s20, 0
      %p177 = por %p175, %p176
      %p178 = scmp.ne.s32.totalorder %s166, %s167
      %p179 = scmp.eq.s32.totalorder %s21, 1
      %p180 = por %p178, %p179
      %p182 = scmp.ne.s32.totalorder %s167, %s181
      %p183 = scmp.eq.s32.totalorder %s21, 0
      %p184 = por %p182, %p183
      %p185 = scmp.le.s32.totalorder 1, %s15
      %p186 = scmp.lt.s32.totalorder %s15, 3
      %p187 = pnand %p185, %p186
      %p188 = pneg %p187
      // Predicated region
      $region9: #{tpu_custom_call.1} parent=5 // pred_check
        _
      $region10: #{tpu_custom_call.1} parent=5 // pred_check_branch
        %190 = sbr.rel (%p187) target = $region12
      $region11: #{tpu_custom_call.1} parent=5 // pred_region
        %s191 = ssub.s32 %s15, 1
        // Predicated region
        $region13: #{tpu_custom_call.1} parent=11 // pred_check
          %p192 = pneg %p36
        $region14: #{tpu_custom_call.1} parent=11 // pred_check_branch
          %194 = sbr.rel (%p192) target = $region16
        $region15: #{tpu_custom_call.1} parent=11 // pred_region
          %s196 = ssub.s32 2048, 2048
          %197 = vsyncadd [#allocation4], %s196
          %s198 = sshll.u32 [#allocation3], 4
          %s199 = int_to_ptr.vmem [resolvable:$true] %s198
          %204 = dma.hbm_to_vmem [thread:$0]  %s0, 2048, %s199, [#allocation4], 128, 128, 8
        $region16: #{tpu_custom_call.1} parent=11 // pred_fallthru
          _
        // Predicated region
        $region17: #{tpu_custom_call.1} parent=11 // pred_check
          %p205 = pneg %p57
        $region18: #{tpu_custom_call.1} parent=11 // pred_check_branch
          %207 = sbr.rel (%p205) target = $region20
        $region19: #{tpu_custom_call.1} parent=11 // pred_region
          %s209 = ssub.s32 2048, 2048
          %210 = vsyncadd [#allocation7], %s209
          %s211 = sshll.u32 [#allocation6], 4
          %s212 = int_to_ptr.vmem [resolvable:$true] %s211
          %217 = dma.hbm_to_vmem [thread:$0]  %s1, 2048, %s212, [#allocation7], 128, 128, 8
        $region20: #{tpu_custom_call.1} parent=11 // pred_fallthru
          _
        // Predicated region
        $region21: #{tpu_custom_call.1} parent=11 // pred_check
          %p218 = pneg %p78
        $region22: #{tpu_custom_call.1} parent=11 // pred_check_branch
          %220 = sbr.rel (%p218) target = $region24
        $region23: #{tpu_custom_call.1} parent=11 // pred_region
          _
        $region24: #{tpu_custom_call.1} parent=11 // pred_fallthru
          _
      $region12: #{tpu_custom_call.1} parent=5 // pred_fallthru
        _
      %p221 = scmp.lt.s32.totalorder %s15, 2
      // Predicated region
      $region25: #{tpu_custom_call.1} parent=5 // pred_check
        %p222 = pneg %p221
      $region26: #{tpu_custom_call.1} parent=5 // pred_check_branch
        %224 = sbr.rel (%p222) target = $region28
      $region27: #{tpu_custom_call.1} parent=5 // pred_region
        // Predicated region
        $region29: #{tpu_custom_call.1} parent=27 // pred_check
          %p225 = pneg %p98
        $region30: #{tpu_custom_call.1} parent=27 // pred_check_branch
          %227 = sbr.rel (%p225) target = $region32
        $region31: #{tpu_custom_call.1} parent=27 // pred_region
          %s228 = sand.u32 %s15, 1
          %s229 = scalar_lea.sflag [#allocation4], %s228
          %s230 = sand.u32 %s88, 1
          %s231 = smul.addr %s230, 192
          %s232 = scalar_lea.vmem [#allocation8], %s231
          %s234 = ssub.s32 3072, 3072
          %235 = vsyncadd %s229, %s234
          %s236 = smul.addr %s15, 48
          %s237 = smul.addr %s236, 64
          %s238 = scalar_lea.hbm %s3, %s237
          %s239 = sshll.u32 %s232, 4
          %s240 = int_to_ptr.vmem [resolvable:$true] %s239
          %245 = dma.hbm_to_vmem [thread:$0]  %s238, 3072, %s240, %s229, 64, 64, 4
        $region32: #{tpu_custom_call.1} parent=27 // pred_fallthru
          _
        // Predicated region
        $region33: #{tpu_custom_call.1} parent=27 // pred_check
          %p246 = pneg %p124
        $region34: #{tpu_custom_call.1} parent=27 // pred_check_branch
          %248 = sbr.rel (%p246) target = $region36
        $region35: #{tpu_custom_call.1} parent=27 // pred_region
          %s249 = sand.u32 %s15, 1
          %s250 = scalar_lea.sflag [#allocation4], %s249
          %s251 = sand.u32 %s114, 1
          %s252 = smul.addr %s251, 384
          %s253 = scalar_lea.vmem [#allocation9], %s252
          %s255 = ssub.s32 6144, 6144
          %256 = vsyncadd %s250, %s255
          %s257 = smul.addr %s15, 48
          %s258 = smul.addr %s257, 128
          %s259 = scalar_lea.hbm %s4, %s258
          %s260 = sshll.u32 %s253, 4
          %s261 = int_to_ptr.vmem [resolvable:$true] %s260
          %266 = dma.hbm_to_vmem [thread:$0]  %s259, 6144, %s261, %s250, 128, 128, 8
        $region36: #{tpu_custom_call.1} parent=27 // pred_fallthru
          _
        // Predicated region
        $region37: #{tpu_custom_call.1} parent=27 // pred_check
          %p267 = pneg %p150
        $region38: #{tpu_custom_call.1} parent=27 // pred_check_branch
          %269 = sbr.rel (%p267) target = $region40
        $region39: #{tpu_custom_call.1} parent=27 // pred_region
          %p270 = scmp.lt.s32.totalorder %s15, 1
          %s271 = scalar_select %p270, %s15, 1
          %s272 = scalar_lea.vmem %s5, %s271
        $region40: #{tpu_custom_call.1} parent=27 // pred_fallthru
          _
      $region28: #{tpu_custom_call.1} parent=5 // pred_fallthru
        _
      %p273 = scmp.le.s32.totalorder 1, %s15
      %p274 = scmp.lt.s32.totalorder %s15, 3
      %p275 = pnand %p273, %p274
      %p276 = pneg %p275
      // Predicated region
      $region41: #{tpu_custom_call.1} parent=5 // pred_check
        _
      $region42: #{tpu_custom_call.1} parent=5 // pred_check_branch
        %278 = sbr.rel (%p275) target = $region44
      $region43: #{tpu_custom_call.1} parent=5 // pred_region
        %s279 = ssub.s32 %s15, 1
        // Predicated region
        $region45: #{tpu_custom_call.1} parent=43 // pred_check
          %p280 = pneg %p36
        $region46: #{tpu_custom_call.1} parent=43 // pred_check_branch
          %282 = sbr.rel (%p280) target = $region48
        $region47: #{tpu_custom_call.1} parent=43 // pred_region
          %283 = dma.done [#allocation4], 2048
        $region48: #{tpu_custom_call.1} parent=43 // pred_fallthru
          _
        // Predicated region
        $region49: #{tpu_custom_call.1} parent=43 // pred_check
          %p284 = pneg %p57
        $region50: #{tpu_custom_call.1} parent=43 // pred_check_branch
          %286 = sbr.rel (%p284) target = $region52
        $region51: #{tpu_custom_call.1} parent=43 // pred_region
          %287 = dma.done [#allocation7], 2048
        $region52: #{tpu_custom_call.1} parent=43 // pred_fallthru
          _
        %s288 = sand.u32 %s20, 1
        %s289 = scalar_lea.sflag [#allocation4], %s288
        %s290 = sand.u32 %s91, 1
        %s291 = smul.addr %s290, 192
        %s292 = scalar_lea.vmem [#allocation8], %s291
        // Predicated region
        $region53: #{tpu_custom_call.1} parent=43 // pred_check
          %p293 = pneg %p104
        $region54: #{tpu_custom_call.1} parent=43 // pred_check_branch
          %295 = sbr.rel (%p293) target = $region56
        $region55: #{tpu_custom_call.1} parent=43 // pred_region
          %296 = dma.done %s289, 3072
        $region56: #{tpu_custom_call.1} parent=43 // pred_fallthru
          _
        %s297 = sand.u32 %s20, 1
        %s298 = scalar_lea.sflag [#allocation4], %s297
        %s299 = sand.u32 %s117, 1
        %s300 = smul.addr %s299, 384
        %s301 = scalar_lea.vmem [#allocation9], %s300
        // Predicated region
        $region57: #{tpu_custom_call.1} parent=43 // pred_check
          %p302 = pneg %p130
        $region58: #{tpu_custom_call.1} parent=43 // pred_check_branch
          %304 = sbr.rel (%p302) target = $region60
        $region59: #{tpu_custom_call.1} parent=43 // pred_region
          %305 = dma.done %s298, 6144
        $region60: #{tpu_custom_call.1} parent=43 // pred_fallthru
          _
        %p306 = pneg %p36
        %p307 = pneg %p33
        %p308 = pneg %p57
        %p309 = pneg %p54
        %p310 = pneg %p78
        %p311 = pneg %p75
        %s312 = sand.u32 %s20, 1
        %s313 = scalar_lea.sflag [#allocation4], %s312
        %s314 = sand.u32 %s91, 1
        %s315 = smul.addr %s314, 192
        %s316 = scalar_lea.vmem [#allocation8], %s315
        %p317 = pneg %p104
        %p318 = pneg %p101
        %s319 = sand.u32 %s20, 1
        %s320 = scalar_lea.sflag [#allocation4], %s319
        %s321 = sand.u32 %s117, 1
        %s322 = smul.addr %s321, 384
        %s323 = scalar_lea.vmem [#allocation9], %s322
        %p324 = pneg %p130
        %p325 = pneg %p127
        %p326 = scmp.lt.s32.totalorder %s20, 1
        %s327 = scalar_select %p326, %s20, 1
        %s328 = scalar_lea.vmem %s5, %s327
        %p329 = pneg %p156
        %p330 = pneg %p153
        %p331 = pneg %p177
        %p332 = pneg %p174
        %p333 = scmp.lt.s32.totalorder %s20, 1
        %s334 = scalar_select %p333, %s20, 1
        %s335 = scalar_lea.vmem %s5, %s334
        %p336 = scmp.eq.s32.totalorder %s20, 0
        // Predicated region
        $region61: #{tpu_custom_call.1} parent=43 // pred_check
          %p337 = pneg %p336
        $region62: #{tpu_custom_call.1} parent=43 // pred_check_branch
          %339 = sbr.rel (%p337) target = $region64
        $region63: #{tpu_custom_call.1} parent=43 // pred_region
          %v340 = vld [vmem:[#allocation3] sm:$0xff]
          %v341 = vld [vmem:[#allocation3 + $0x8] sm:$0xff]
          %v342 = vld [vmem:[#allocation3 + $0x10] sm:$0xff]
          %v343 = vld [vmem:[#allocation3 + $0x18] sm:$0xff]
          %v344 = vld [vmem:[#allocation3 + $0x20] sm:$0xff]
          %v345 = vld [vmem:[#allocation3 + $0x28] sm:$0xff]
          %v346 = vld [vmem:[#allocation3 + $0x30] sm:$0xff]
          %v347 = vld [vmem:[#allocation3 + $0x38] sm:$0xff]
          %v348 = vld [vmem:[#allocation3 + $0x40] sm:$0xff]
          %v349 = vld [vmem:[#allocation3 + $0x48] sm:$0xff]
          %v350 = vld [vmem:[#allocation3 + $0x50] sm:$0xff]
          %v351 = vld [vmem:[#allocation3 + $0x58] sm:$0xff]
          %v352 = vld [vmem:[#allocation3 + $0x60] sm:$0xff]
          %v353 = vld [vmem:[#allocation3 + $0x68] sm:$0xff]
          %v354 = vld [vmem:[#allocation3 + $0x70] sm:$0xff]
          %v355 = vld [vmem:[#allocation3 + $0x78] sm:$0xff]
          %v356 = vld [vmem:[#allocation6] sm:$0xff]
          %v357 = vld [vmem:[#allocation6 + $0x8] sm:$0xff]
          %v358 = vld [vmem:[#allocation6 + $0x10] sm:$0xff]
          %v359 = vld [vmem:[#allocation6 + $0x18] sm:$0xff]
          %v360 = vld [vmem:[#allocation6 + $0x20] sm:$0xff]
          %v361 = vld [vmem:[#allocation6 + $0x28] sm:$0xff]
          %v362 = vld [vmem:[#allocation6 + $0x30] sm:$0xff]
          %v363 = vld [vmem:[#allocation6 + $0x38] sm:$0xff]
          %v364 = vld [vmem:[#allocation6 + $0x40] sm:$0xff]
          %v365 = vld [vmem:[#allocation6 + $0x48] sm:$0xff]
          %v366 = vld [vmem:[#allocation6 + $0x50] sm:$0xff]
          %v367 = vld [vmem:[#allocation6 + $0x58] sm:$0xff]
          %v368 = vld [vmem:[#allocation6 + $0x60] sm:$0xff]
          %v369 = vld [vmem:[#allocation6 + $0x68] sm:$0xff]
          %v370 = vld [vmem:[#allocation6 + $0x70] sm:$0xff]
          %v371 = vld [vmem:[#allocation6 + $0x78] sm:$0xff]
          %v372 = vld [vmem:[%s2] sm:$0x1]
          %v374 = vlaneseq
          %v375 = vshrl.u32 %v374, 7
          %v376 = vsub.s32 0, %v375
          %v377 = vrot.slane %v372, %v376
          %379 = vmatprep.subr.mxu0 0.0
          %380 = vmatpush1.msra.mxu0 %v371
          %381 = vmatprep.subr.mxu0 0.0
          %382 = vmatpush1.msra.mxu0 %v370
          %383 = vmatprep.subr.mxu0 0.0
          %384 = vmatpush1.msra.mxu0 %v369
          %385 = vmatprep.subr.mxu0 0.0
          %386 = vmatpush1.msra.mxu0 %v368
          %387 = vmatprep.subr.mxu0 0.0
          %388 = vmatpush1.msra.mxu0 %v367
          %389 = vmatprep.subr.mxu0 0.0
          %390 = vmatpush1.msra.mxu0 %v366
          %391 = vmatprep.subr.mxu0 0.0
          %392 = vmatpush1.msra.mxu0 %v365
          %393 = vmatprep.subr.mxu0 0.0
          %394 = vmatpush1.msra.mxu0 %v364
          %395 = vmatprep.subr.mxu0 0.0
          %396 = vmatpush1.msra.mxu0 %v363
          %397 = vmatprep.subr.mxu0 0.0
          %398 = vmatpush1.msra.mxu0 %v362
          %399 = vmatprep.subr.mxu0 0.0
          %400 = vmatpush1.msra.mxu0 %v361
          %401 = vmatprep.subr.mxu0 0.0
          %402 = vmatpush1.msra.mxu0 %v360
          %403 = vmatprep.subr.mxu0 0.0
          %404 = vmatpush1.msra.mxu0 %v359
          %405 = vmatprep.subr.mxu0 0.0
          %406 = vmatpush1.msra.mxu0 %v358
          %407 = vmatprep.subr.mxu0 0.0
          %408 = vmatpush1.msra.mxu0 %v357
          %409 = vmatprep.subr.mxu0 0.0
          %410 = vmatpush1.msra.mxu0 %v356
          %411 = vmatprep.subr.mxu0 0.0
          %412 = vmatpush2.msra.mxu0 0.0
          %413 = vmatprep.subr.mxu0 0.0
          %414 = vmatpush2.msra.mxu0 0.0
          %415 = vmatprep.subr.mxu0 0.0
          %416 = vmatpush2.msra.mxu0 0.0
          %417 = vmatprep.subr.mxu0 0.0
          %418 = vmatpush2.msra.mxu0 0.0
          %419 = vmatprep.subr.mxu0 0.0
          %420 = vmatpush2.msra.mxu0 0.0
          %421 = vmatprep.subr.mxu0 0.0
          %422 = vmatpush2.msra.mxu0 0.0
          %423 = vmatprep.subr.mxu0 0.0
          %424 = vmatpush2.msra.mxu0 0.0
          %425 = vmatprep.subr.mxu0 0.0
          %426 = vmatpush2.msra.mxu0 0.0
          %427 = vmatprep.subr.mxu0 0.0
          %428 = vmatpush2.msra.mxu0 0.0
          %429 = vmatprep.subr.mxu0 0.0
          %430 = vmatpush2.msra.mxu0 0.0
          %431 = vmatprep.subr.mxu0 0.0
          %432 = vmatpush2.msra.mxu0 0.0
          %433 = vmatprep.subr.mxu0 0.0
          %434 = vmatpush2.msra.mxu0 0.0
          %435 = vmatprep.subr.mxu0 0.0
          %436 = vmatpush2.msra.mxu0 0.0
          %437 = vmatprep.subr.mxu0 0.0
          %438 = vmatpush2.msra.mxu0 0.0
          %439 = vmatprep.subr.mxu0 0.0
          %440 = vmatpush2.msra.mxu0 0.0
          %441 = vmatprep.subr.mxu0 0.0
          %442 = vmatpush2.msra.mxu0 0.0
          %443 = vmatprep.mubr.f32.mxu0 0.0
          %444 = vmatmul.mubr.f32.gmra.mxu0 %v340
          %v445 = vpop.f32.mrf.mxu0
          %v446 = vadd.f32 %v377, %v445
          %v447 = vpop.f32.mrf.mxu0
          %448 = vmatprep.mubr.f32.mxu0 0.0
          %449 = vmatmul.mubr.f32.gmra.mxu0 %v341
          %v450 = vpop.f32.mrf.mxu0
          %v451 = vadd.f32 %v377, %v450
          %v452 = vpop.f32.mrf.mxu0
          %453 = vmatprep.mubr.f32.mxu0 0.0
          %454 = vmatmul.mubr.f32.gmra.mxu0 %v342
          %v455 = vpop.f32.mrf.mxu0
          %v456 = vadd.f32 %v377, %v455
          %v457 = vpop.f32.mrf.mxu0
          %458 = vmatprep.mubr.f32.mxu0 0.0
          %459 = vmatmul.mubr.f32.gmra.mxu0 %v343
          %v460 = vpop.f32.mrf.mxu0
          %v461 = vadd.f32 %v377, %v460
          %v462 = vpop.f32.mrf.mxu0
          %463 = vmatprep.mubr.f32.mxu0 0.0
          %464 = vmatmul.mubr.f32.gmra.mxu0 %v344
          %v465 = vpop.f32.mrf.mxu0
          %v466 = vadd.f32 %v377, %v465
          %v467 = vpop.f32.mrf.mxu0
          %468 = vmatprep.mubr.f32.mxu0 0.0
          %469 = vmatmul.mubr.f32.gmra.mxu0 %v345
          %v470 = vpop.f32.mrf.mxu0
          %v471 = vadd.f32 %v377, %v470
          %v472 = vpop.f32.mrf.mxu0
          %473 = vmatprep.mubr.f32.mxu0 0.0
          %474 = vmatmul.mubr.f32.gmra.mxu0 %v346
          %v475 = vpop.f32.mrf.mxu0
          %v476 = vadd.f32 %v377, %v475
          %v477 = vpop.f32.mrf.mxu0
          %478 = vmatprep.mubr.f32.mxu0 0.0
          %479 = vmatmul.mubr.f32.gmra.mxu0 %v347
          %v480 = vpop.f32.mrf.mxu0
          %v481 = vadd.f32 %v377, %v480
          %v482 = vpop.f32.mrf.mxu0
          %483 = vmatprep.mubr.f32.mxu0 0.0
          %484 = vmatmul.mubr.f32.gmra.mxu0 %v348
          %v485 = vpop.f32.mrf.mxu0
          %v486 = vadd.f32 %v377, %v485
          %v487 = vpop.f32.mrf.mxu0
          %488 = vmatprep.mubr.f32.mxu0 0.0
          %489 = vmatmul.mubr.f32.gmra.mxu0 %v349
          %v490 = vpop.f32.mrf.mxu0
          %v491 = vadd.f32 %v377, %v490
          %v492 = vpop.f32.mrf.mxu0
          %493 = vmatprep.mubr.f32.mxu0 0.0
          %494 = vmatmul.mubr.f32.gmra.mxu0 %v350
          %v495 = vpop.f32.mrf.mxu0
          %v496 = vadd.f32 %v377, %v495
          %v497 = vpop.f32.mrf.mxu0
          %498 = vmatprep.mubr.f32.mxu0 0.0
          %499 = vmatmul.mubr.f32.gmra.mxu0 %v351
          %v500 = vpop.f32.mrf.mxu0
          %v501 = vadd.f32 %v377, %v500
          %v502 = vpop.f32.mrf.mxu0
          %503 = vmatprep.mubr.f32.mxu0 0.0
          %504 = vmatmul.mubr.f32.gmra.mxu0 %v352
          %v505 = vpop.f32.mrf.mxu0
          %v506 = vadd.f32 %v377, %v505
          %v507 = vpop.f32.mrf.mxu0
          %508 = vmatprep.mubr.f32.mxu0 0.0
          %509 = vmatmul.mubr.f32.gmra.mxu0 %v353
          %v510 = vpop.f32.mrf.mxu0
          %v511 = vadd.f32 %v377, %v510
          %v512 = vpop.f32.mrf.mxu0
          %513 = vmatprep.mubr.f32.mxu0 0.0
          %514 = vmatmul.mubr.f32.gmra.mxu0 %v354
          %v515 = vpop.f32.mrf.mxu0
          %v516 = vadd.f32 %v377, %v515
          %v517 = vpop.f32.mrf.mxu0
          %518 = vmatprep.mubr.f32.mxu0 0.0
          %519 = vmatmul.mubr.f32.gmra.mxu0 %v355
          %v520 = vpop.f32.mrf.mxu0
          %v521 = vadd.f32 %v377, %v520
          %v522 = vpop.f32.mrf.mxu0
          %523 = vdwg.mxu0
          %524 = vst [vmem:[#allocation10] sm:$0xff] %v446
          %525 = vst [vmem:[#allocation10 + $0x8] sm:$0xff] %v451
          %526 = vst [vmem:[#allocation10 + $0x10] sm:$0xff] %v456
          %527 = vst [vmem:[#allocation10 + $0x18] sm:$0xff] %v461
          %528 = vst [vmem:[#allocation10 + $0x20] sm:$0xff] %v466
          %529 = vst [vmem:[#allocation10 + $0x28] sm:$0xff] %v471
          %530 = vst [vmem:[#allocation10 + $0x30] sm:$0xff] %v476
          %531 = vst [vmem:[#allocation10 + $0x38] sm:$0xff] %v481
          %532 = vst [vmem:[#allocation10 + $0x40] sm:$0xff] %v486
          %533 = vst [vmem:[#allocation10 + $0x48] sm:$0xff] %v491
          %534 = vst [vmem:[#allocation10 + $0x50] sm:$0xff] %v496
          %535 = vst [vmem:[#allocation10 + $0x58] sm:$0xff] %v501
          %536 = vst [vmem:[#allocation10 + $0x60] sm:$0xff] %v506
          %537 = vst [vmem:[#allocation10 + $0x68] sm:$0xff] %v511
          %538 = vst [vmem:[#allocation10 + $0x70] sm:$0xff] %v516
          %539 = vst [vmem:[#allocation10 + $0x78] sm:$0xff] %v521
        $region64: #{tpu_custom_call.1} parent=43 // pred_fallthru
          _
        %v540 = vld [vmem:[#allocation10] sm:$0xff]
        %v541 = vld [vmem:[#allocation10 + $0x8] sm:$0xff]
        %v542 = vld [vmem:[#allocation10 + $0x10] sm:$0xff]
        %v543 = vld [vmem:[#allocation10 + $0x18] sm:$0xff]
        %v544 = vld [vmem:[#allocation10 + $0x20] sm:$0xff]
        %v545 = vld [vmem:[#allocation10 + $0x28] sm:$0xff]
        %v546 = vld [vmem:[#allocation10 + $0x30] sm:$0xff]
        %v547 = vld [vmem:[#allocation10 + $0x38] sm:$0xff]
        %v548 = vld [vmem:[#allocation10 + $0x40] sm:$0xff]
        %v549 = vld [vmem:[#allocation10 + $0x48] sm:$0xff]
        %v550 = vld [vmem:[#allocation10 + $0x50] sm:$0xff]
        %v551 = vld [vmem:[#allocation10 + $0x58] sm:$0xff]
        %v552 = vld [vmem:[#allocation10 + $0x60] sm:$0xff]
        %v553 = vld [vmem:[#allocation10 + $0x68] sm:$0xff]
        %v554 = vld [vmem:[#allocation10 + $0x70] sm:$0xff]
        %v555 = vld [vmem:[#allocation10 + $0x78] sm:$0xff]
        %v556 = vld [vmem:[%s292] sm:$0xf]
        %v557 = vld [vmem:[%s292 + $0x4] sm:$0xf]
        %v558 = vld [vmem:[%s292 + $0x8] sm:$0xf]
        %v559 = vld [vmem:[%s292 + $0xc] sm:$0xf]
        %v560 = vld [vmem:[%s292 + $0x10] sm:$0xf]
        %v561 = vld [vmem:[%s292 + $0x14] sm:$0xf]
        %v562 = vld [vmem:[%s292 + $0x18] sm:$0xf]
        %v563 = vld [vmem:[%s292 + $0x1c] sm:$0xf]
        %v564 = vld [vmem:[%s292 + $0x20] sm:$0xf]
        %v565 = vld [vmem:[%s292 + $0x24] sm:$0xf]
        %v566 = vld [vmem:[%s292 + $0x28] sm:$0xf]
        %v567 = vld [vmem:[%s292 + $0x2c] sm:$0xf]
        %v568 = vld [vmem:[%s292 + $0x30] sm:$0xf]
        %v569 = vld [vmem:[%s292 + $0x34] sm:$0xf]
        %v570 = vld [vmem:[%s292 + $0x38] sm:$0xf]
        %v571 = vld [vmem:[%s292 + $0x3c] sm:$0xf]
        %v572 = vunpack.c.l.bf16 %v556
        %v573 = vunpack.c.l.bf16 %v557
        %v574 = vunpack.c.l.bf16 %v558
        %v575 = vunpack.c.l.bf16 %v559
        %v576 = vunpack.c.l.bf16 %v560
        %v577 = vunpack.c.l.bf16 %v561
        %v578 = vunpack.c.l.bf16 %v562
        %v579 = vunpack.c.l.bf16 %v563
        %v580 = vunpack.c.l.bf16 %v564
        %v581 = vunpack.c.l.bf16 %v565
        %v582 = vunpack.c.l.bf16 %v566
        %v583 = vunpack.c.l.bf16 %v567
        %v584 = vunpack.c.l.bf16 %v568
        %v585 = vunpack.c.l.bf16 %v569
        %v586 = vunpack.c.l.bf16 %v570
        %v587 = vunpack.c.l.bf16 %v571
        %588 = vmatprep.subr.mxu0 0.0
        %589 = vmatpush1.msra.mxu0 %v555
        %590 = vmatprep.subr.mxu0 0.0
        %591 = vmatpush1.msra.mxu0 %v554
        %592 = vmatprep.subr.mxu0 0.0
        %593 = vmatpush1.msra.mxu0 %v553
        %594 = vmatprep.subr.mxu0 0.0
        %595 = vmatpush1.msra.mxu0 %v552
        %596 = vmatprep.subr.mxu0 0.0
        %597 = vmatpush1.msra.mxu0 %v551
        %598 = vmatprep.subr.mxu0 0.0
        %599 = vmatpush1.msra.mxu0 %v550
        %600 = vmatprep.subr.mxu0 0.0
        %601 = vmatpush1.msra.mxu0 %v549
        %602 = vmatprep.subr.mxu0 0.0
        %603 = vmatpush1.msra.mxu0 %v548
        %604 = vmatprep.subr.mxu0 0.0
        %605 = vmatpush1.msra.mxu0 %v547
        %606 = vmatprep.subr.mxu0 0.0
        %607 = vmatpush1.msra.mxu0 %v546
        %608 = vmatprep.subr.mxu0 0.0
        %609 = vmatpush1.msra.mxu0 %v545
        %610 = vmatprep.subr.mxu0 0.0
        %611 = vmatpush1.msra.mxu0 %v544
        %612 = vmatprep.subr.mxu0 0.0
        %613 = vmatpush1.msra.mxu0 %v543
        %614 = vmatprep.subr.mxu0 0.0
        %615 = vmatpush1.msra.mxu0 %v542
        %616 = vmatprep.subr.mxu0 0.0
        %617 = vmatpush1.msra.mxu0 %v541
        %618 = vmatprep.subr.mxu0 0.0
        %619 = vmatpush1.msra.mxu0 %v540
        %620 = vmatprep.subr.mxu0 0.0
        %621 = vmatpush2.msra.mxu0 0.0
        %622 = vmatprep.subr.mxu0 0.0
        %623 = vmatpush2.msra.mxu0 0.0
        %624 = vmatprep.subr.mxu0 0.0
        %625 = vmatpush2.msra.mxu0 0.0
        %626 = vmatprep.subr.mxu0 0.0
        %627 = vmatpush2.msra.mxu0 0.0
        %628 = vmatprep.subr.mxu0 0.0
        %629 = vmatpush2.msra.mxu0 0.0
        %630 = vmatprep.subr.mxu0 0.0
        %631 = vmatpush2.msra.mxu0 0.0
        %632 = vmatprep.subr.mxu0 0.0
        %633 = vmatpush2.msra.mxu0 0.0
        %634 = vmatprep.subr.mxu0 0.0
        %635 = vmatpush2.msra.mxu0 0.0
        %636 = vmatprep.subr.mxu0 0.0
        %637 = vmatpush2.msra.mxu0 0.0
        %638 = vmatprep.subr.mxu0 0.0
        %639 = vmatpush2.msra.mxu0 0.0
        %640 = vmatprep.subr.mxu0 0.0
        %641 = vmatpush2.msra.mxu0 0.0
        %642 = vmatprep.subr.mxu0 0.0
        %643 = vmatpush2.msra.mxu0 0.0
        %644 = vmatprep.subr.mxu0 0.0
        %645 = vmatpush2.msra.mxu0 0.0
        %646 = vmatprep.subr.mxu0 0.0
        %647 = vmatpush2.msra.mxu0 0.0
        %648 = vmatprep.subr.mxu0 0.0
        %649 = vmatpush2.msra.mxu0 0.0
        %650 = vmatprep.subr.mxu0 0.0
        %651 = vmatpush2.msra.mxu0 0.0
        %652 = vmatprep.mubr.f32.mxu0 0.0
        %653 = vmatmul.mubr.f32.gmra.mxu0 %v572
        %v654 = vpop.f32.mrf.mxu0
        %v655 = vadd.f32 0.0, %v654
        %v656 = vpop.f32.mrf.mxu0
        %657 = vmatprep.mubr.f32.mxu0 0.0
        %658 = vmatmul.mubr.f32.gmra.mxu0 %v573
        %v659 = vpop.f32.mrf.mxu0
        %v660 = vadd.f32 0.0, %v659
        %v661 = vpop.f32.mrf.mxu0
        %662 = vmatprep.mubr.f32.mxu0 0.0
        %663 = vmatmul.mubr.f32.gmra.mxu0 %v574
        %v664 = vpop.f32.mrf.mxu0
        %v665 = vadd.f32 0.0, %v664
        %v666 = vpop.f32.mrf.mxu0
        %667 = vmatprep.mubr.f32.mxu0 0.0
        %668 = vmatmul.mubr.f32.gmra.mxu0 %v575
        %v669 = vpop.f32.mrf.mxu0
        %v670 = vadd.f32 0.0, %v669
        %v671 = vpop.f32.mrf.mxu0
        %672 = vmatprep.mubr.f32.mxu0 0.0
        %673 = vmatmul.mubr.f32.gmra.mxu0 %v576
        %v674 = vpop.f32.mrf.mxu0
        %v675 = vadd.f32 0.0, %v674
        %v676 = vpop.f32.mrf.mxu0
        %677 = vmatprep.mubr.f32.mxu0 0.0
        %678 = vmatmul.mubr.f32.gmra.mxu0 %v577
        %v679 = vpop.f32.mrf.mxu0
        %v680 = vadd.f32 0.0, %v679
        %v681 = vpop.f32.mrf.mxu0
        %682 = vmatprep.mubr.f32.mxu0 0.0
        %683 = vmatmul.mubr.f32.gmra.mxu0 %v578
        %v684 = vpop.f32.mrf.mxu0
        %v685 = vadd.f32 0.0, %v684
        %v686 = vpop.f32.mrf.mxu0
        %687 = vmatprep.mubr.f32.mxu0 0.0
        %688 = vmatmul.mubr.f32.gmra.mxu0 %v579
        %v689 = vpop.f32.mrf.mxu0
        %v690 = vadd.f32 0.0, %v689
        %v691 = vpop.f32.mrf.mxu0
        %692 = vmatprep.mubr.f32.mxu0 0.0
        %693 = vmatmul.mubr.f32.gmra.mxu0 %v580
        %v694 = vpop.f32.mrf.mxu0
        %v695 = vadd.f32 0.0, %v694
        %v696 = vpop.f32.mrf.mxu0
        %697 = vmatprep.mubr.f32.mxu0 0.0
        %698 = vmatmul.mubr.f32.gmra.mxu0 %v581
        %v699 = vpop.f32.mrf.mxu0
        %v700 = vadd.f32 0.0, %v699
        %v701 = vpop.f32.mrf.mxu0
        %702 = vmatprep.mubr.f32.mxu0 0.0
        %703 = vmatmul.mubr.f32.gmra.mxu0 %v582
        %v704 = vpop.f32.mrf.mxu0
        %v705 = vadd.f32 0.0, %v704
        %v706 = vpop.f32.mrf.mxu0
        %707 = vmatprep.mubr.f32.mxu0 0.0
        %708 = vmatmul.mubr.f32.gmra.mxu0 %v583
        %v709 = vpop.f32.mrf.mxu0
        %v710 = vadd.f32 0.0, %v709
        %v711 = vpop.f32.mrf.mxu0
        %712 = vmatprep.mubr.f32.mxu0 0.0
        %713 = vmatmul.mubr.f32.gmra.mxu0 %v584
        %v714 = vpop.f32.mrf.mxu0
        %v715 = vadd.f32 0.0, %v714
        %v716 = vpop.f32.mrf.mxu0
        %717 = vmatprep.mubr.f32.mxu0 0.0
        %718 = vmatmul.mubr.f32.gmra.mxu0 %v585
        %v719 = vpop.f32.mrf.mxu0
        %v720 = vadd.f32 0.0, %v719
        %v721 = vpop.f32.mrf.mxu0
        %722 = vmatprep.mubr.f32.mxu0 0.0
        %723 = vmatmul.mubr.f32.gmra.mxu0 %v586
        %v724 = vpop.f32.mrf.mxu0
        %v725 = vadd.f32 0.0, %v724
        %v726 = vpop.f32.mrf.mxu0
        %727 = vmatprep.mubr.f32.mxu0 0.0
        %728 = vmatmul.mubr.f32.gmra.mxu0 %v587
        %v729 = vpop.f32.mrf.mxu0
        %v730 = vadd.f32 0.0, %v729
        %v731 = vpop.f32.mrf.mxu0
        %732 = vdwg.mxu0
        %733 = vadd.xlane.f32.xlu0 %v572
        %v734 = vpop.xlane.xlu0 %733
        %735 = vadd.xlane.f32.xlu0 %v573
        %v736 = vpop.xlane.xlu0 %735
        %737 = vadd.xlane.f32.xlu0 %v574
        %v738 = vpop.xlane.xlu0 %737
        %739 = vadd.xlane.f32.xlu0 %v575
        %v740 = vpop.xlane.xlu0 %739
        %741 = vadd.xlane.f32.xlu0 %v576
        %v742 = vpop.xlane.xlu0 %741
        %743 = vadd.xlane.f32.xlu0 %v577
        %v744 = vpop.xlane.xlu0 %743
        %745 = vadd.xlane.f32.xlu0 %v578
        %v746 = vpop.xlane.xlu0 %745
        %747 = vadd.xlane.f32.xlu0 %v579
        %v748 = vpop.xlane.xlu0 %747
        %749 = vadd.xlane.f32.xlu0 %v580
        %v750 = vpop.xlane.xlu0 %749
        %751 = vadd.xlane.f32.xlu0 %v581
        %v752 = vpop.xlane.xlu0 %751
        %753 = vadd.xlane.f32.xlu0 %v582
        %v754 = vpop.xlane.xlu0 %753
        %755 = vadd.xlane.f32.xlu0 %v583
        %v756 = vpop.xlane.xlu0 %755
        %757 = vadd.xlane.f32.xlu0 %v584
        %v758 = vpop.xlane.xlu0 %757
        %759 = vadd.xlane.f32.xlu0 %v585
        %v760 = vpop.xlane.xlu0 %759
        %761 = vadd.xlane.f32.xlu0 %v586
        %v762 = vpop.xlane.xlu0 %761
        %763 = vadd.xlane.f32.xlu0 %v587
        %v764 = vpop.xlane.xlu0 %763
        %v765 = vmax.f32 %v734, 1.0
        %v766 = vmax.f32 %v736, 1.0
        %v767 = vmax.f32 %v738, 1.0
        %v768 = vmax.f32 %v740, 1.0
        %v769 = vmax.f32 %v742, 1.0
        %v770 = vmax.f32 %v744, 1.0
        %v771 = vmax.f32 %v746, 1.0
        %v772 = vmax.f32 %v748, 1.0
        %v773 = vmax.f32 %v750, 1.0
        %v774 = vmax.f32 %v752, 1.0
        %v775 = vmax.f32 %v754, 1.0
        %v776 = vmax.f32 %v756, 1.0
        %v777 = vmax.f32 %v758, 1.0
        %v778 = vmax.f32 %v760, 1.0
        %v779 = vmax.f32 %v762, 1.0
        %v780 = vmax.f32 %v764, 1.0
        %v781 = vrcp.pop %v765
        %v782 = vmul.f32 1.0, %v781
        %v783 = vrcp.pop %v766
        %v784 = vmul.f32 1.0, %v783
        %v785 = vrcp.pop %v767
        %v786 = vmul.f32 1.0, %v785
        %v787 = vrcp.pop %v768
        %v788 = vmul.f32 1.0, %v787
        %v789 = vrcp.pop %v769
        %v790 = vmul.f32 1.0, %v789
        %v791 = vrcp.pop %v770
        %v792 = vmul.f32 1.0, %v791
        %v793 = vrcp.pop %v771
        %v794 = vmul.f32 1.0, %v793
        %v795 = vrcp.pop %v772
        %v796 = vmul.f32 1.0, %v795
        %v797 = vrcp.pop %v773
        %v798 = vmul.f32 1.0, %v797
        %v799 = vrcp.pop %v774
        %v800 = vmul.f32 1.0, %v799
        %v801 = vrcp.pop %v775
        %v802 = vmul.f32 1.0, %v801
        %v803 = vrcp.pop %v776
        %v804 = vmul.f32 1.0, %v803
        %v805 = vrcp.pop %v777
        %v806 = vmul.f32 1.0, %v805
        %v807 = vrcp.pop %v778
        %v808 = vmul.f32 1.0, %v807
        %v809 = vrcp.pop %v779
        %v810 = vmul.f32 1.0, %v809
        %v811 = vrcp.pop %v780
        %v812 = vmul.f32 1.0, %v811
        %v813 = vmul.f32 %v655, %v782
        %v814 = vmul.f32 %v660, %v784
        %v815 = vmul.f32 %v665, %v786
        %v816 = vmul.f32 %v670, %v788
        %v817 = vmul.f32 %v675, %v790
        %v818 = vmul.f32 %v680, %v792
        %v819 = vmul.f32 %v685, %v794
        %v820 = vmul.f32 %v690, %v796
        %v821 = vmul.f32 %v695, %v798
        %v822 = vmul.f32 %v700, %v800
        %v823 = vmul.f32 %v705, %v802
        %v824 = vmul.f32 %v710, %v804
        %v825 = vmul.f32 %v715, %v806
        %v826 = vmul.f32 %v720, %v808
        %v827 = vmul.f32 %v725, %v810
        %v828 = vmul.f32 %v730, %v812
        %829 = vst [vmem:[#allocation2] sm:$0xff] %v813
        %830 = vst [vmem:[#allocation2 + $0x18] sm:$0xff] %v814
        %831 = vst [vmem:[#allocation2 + $0x30] sm:$0xff] %v815
        %832 = vst [vmem:[#allocation2 + $0x48] sm:$0xff] %v816
        %833 = vst [vmem:[#allocation2 + $0x60] sm:$0xff] %v817
        %834 = vst [vmem:[#allocation2 + $0x78] sm:$0xff] %v818
        %835 = vst [vmem:[#allocation2 + $0x90] sm:$0xff] %v819
        %836 = vst [vmem:[#allocation2 + $0xa8] sm:$0xff] %v820
        %837 = vst [vmem:[#allocation2 + $0xc0] sm:$0xff] %v821
        %838 = vst [vmem:[#allocation2 + $0xd8] sm:$0xff] %v822
        %839 = vst [vmem:[#allocation2 + $0xf0] sm:$0xff] %v823
        %840 = vst [vmem:[#allocation2 + $0x108] sm:$0xff] %v824
        %841 = vst [vmem:[#allocation2 + $0x120] sm:$0xff] %v825
        %842 = vst [vmem:[#allocation2 + $0x138] sm:$0xff] %v826
        %843 = vst [vmem:[#allocation2 + $0x150] sm:$0xff] %v827
        %844 = vst [vmem:[#allocation2 + $0x168] sm:$0xff] %v828
        %s845 = scalar_lea.vmem %s292, 64 [#allocation8]
        %v846 = vld [vmem:[%s845] sm:$0xf]
        %v847 = vld [vmem:[%s845 + $0x4] sm:$0xf]
        %v848 = vld [vmem:[%s845 + $0x8] sm:$0xf]
        %v849 = vld [vmem:[%s845 + $0xc] sm:$0xf]
        %v850 = vld [vmem:[%s845 + $0x10] sm:$0xf]
        %v851 = vld [vmem:[%s845 + $0x14] sm:$0xf]
        %v852 = vld [vmem:[%s845 + $0x18] sm:$0xf]
        %v853 = vld [vmem:[%s845 + $0x1c] sm:$0xf]
        %v854 = vld [vmem:[%s845 + $0x20] sm:$0xf]
        %v855 = vld [vmem:[%s845 + $0x24] sm:$0xf]
        %v856 = vld [vmem:[%s845 + $0x28] sm:$0xf]
        %v857 = vld [vmem:[%s845 + $0x2c] sm:$0xf]
        %v858 = vld [vmem:[%s845 + $0x30] sm:$0xf]
        %v859 = vld [vmem:[%s845 + $0x34] sm:$0xf]
        %v860 = vld [vmem:[%s845 + $0x38] sm:$0xf]
        %v861 = vld [vmem:[%s845 + $0x3c] sm:$0xf]
        %v862 = vunpack.c.l.bf16 %v846
        %v863 = vunpack.c.l.bf16 %v847
        %v864 = vunpack.c.l.bf16 %v848
        %v865 = vunpack.c.l.bf16 %v849
        %v866 = vunpack.c.l.bf16 %v850
        %v867 = vunpack.c.l.bf16 %v851
        %v868 = vunpack.c.l.bf16 %v852
        %v869 = vunpack.c.l.bf16 %v853
        %v870 = vunpack.c.l.bf16 %v854
        %v871 = vunpack.c.l.bf16 %v855
        %v872 = vunpack.c.l.bf16 %v856
        %v873 = vunpack.c.l.bf16 %v857
        %v874 = vunpack.c.l.bf16 %v858
        %v875 = vunpack.c.l.bf16 %v859
        %v876 = vunpack.c.l.bf16 %v860
        %v877 = vunpack.c.l.bf16 %v861
        %878 = vmatprep.subr.mxu0 0.0
        %879 = vmatpush1.msra.mxu0 %v555
        %880 = vmatprep.subr.mxu0 0.0
        %881 = vmatpush1.msra.mxu0 %v554
        %882 = vmatprep.subr.mxu0 0.0
        %883 = vmatpush1.msra.mxu0 %v553
        %884 = vmatprep.subr.mxu0 0.0
        %885 = vmatpush1.msra.mxu0 %v552
        %886 = vmatprep.subr.mxu0 0.0
        %887 = vmatpush1.msra.mxu0 %v551
        %888 = vmatprep.subr.mxu0 0.0
        %889 = vmatpush1.msra.mxu0 %v550
        %890 = vmatprep.subr.mxu0 0.0
        %891 = vmatpush1.msra.mxu0 %v549
        %892 = vmatprep.subr.mxu0 0.0
        %893 = vmatpush1.msra.mxu0 %v548
        %894 = vmatprep.subr.mxu0 0.0
        %895 = vmatpush1.msra.mxu0 %v547
        %896 = vmatprep.subr.mxu0 0.0
        %897 = vmatpush1.msra.mxu0 %v546
        %898 = vmatprep.subr.mxu0 0.0
        %899 = vmatpush1.msra.mxu0 %v545
        %900 = vmatprep.subr.mxu0 0.0
        %901 = vmatpush1.msra.mxu0 %v544
        %902 = vmatprep.subr.mxu0 0.0
        %903 = vmatpush1.msra.mxu0 %v543
        %904 = vmatprep.subr.mxu0 0.0
        %905 = vmatpush1.msra.mxu0 %v542
        %906 = vmatprep.subr.mxu0 0.0
        %907 = vmatpush1.msra.mxu0 %v541
        %908 = vmatprep.subr.mxu0 0.0
        %909 = vmatpush1.msra.mxu0 %v540
        %910 = vmatprep.subr.mxu0 0.0
        %911 = vmatpush2.msra.mxu0 0.0
        %912 = vmatprep.subr.mxu0 0.0
        %913 = vmatpush2.msra.mxu0 0.0
        %914 = vmatprep.subr.mxu0 0.0
        %915 = vmatpush2.msra.mxu0 0.0
        %916 = vmatprep.subr.mxu0 0.0
        %917 = vmatpush2.msra.mxu0 0.0
        %918 = vmatprep.subr.mxu0 0.0
        %919 = vmatpush2.msra.mxu0 0.0
        %920 = vmatprep.subr.mxu0 0.0
        %921 = vmatpush2.msra.mxu0 0.0
        %922 = vmatprep.subr.mxu0 0.0
        %923 = vmatpush2.msra.mxu0 0.0
        %924 = vmatprep.subr.mxu0 0.0
        %925 = vmatpush2.msra.mxu0 0.0
        %926 = vmatprep.subr.mxu0 0.0
        %927 = vmatpush2.msra.mxu0 0.0
        %928 = vmatprep.subr.mxu0 0.0
        %929 = vmatpush2.msra.mxu0 0.0
        %930 = vmatprep.subr.mxu0 0.0
        %931 = vmatpush2.msra.mxu0 0.0
        %932 = vmatprep.subr.mxu0 0.0
        %933 = vmatpush2.msra.mxu0 0.0
        %934 = vmatprep.subr.mxu0 0.0
        %935 = vmatpush2.msra.mxu0 0.0
        %936 = vmatprep.subr.mxu0 0.0
        %937 = vmatpush2.msra.mxu0 0.0
        %938 = vmatprep.subr.mxu0 0.0
        %939 = vmatpush2.msra.mxu0 0.0
        %940 = vmatprep.subr.mxu0 0.0
        %941 = vmatpush2.msra.mxu0 0.0
        %942 = vmatprep.mubr.f32.mxu0 0.0
        %943 = vmatmul.mubr.f32.gmra.mxu0 %v862
        %v944 = vpop.f32.mrf.mxu0
        %v945 = vadd.f32 0.0, %v944
        %v946 = vpop.f32.mrf.mxu0
        %947 = vmatprep.mubr.f32.mxu0 0.0
        %948 = vmatmul.mubr.f32.gmra.mxu0 %v863
        %v949 = vpop.f32.mrf.mxu0
        %v950 = vadd.f32 0.0, %v949
        %v951 = vpop.f32.mrf.mxu0
        %952 = vmatprep.mubr.f32.mxu0 0.0
        %953 = vmatmul.mubr.f32.gmra.mxu0 %v864
        %v954 = vpop.f32.mrf.mxu0
        %v955 = vadd.f32 0.0, %v954
        %v956 = vpop.f32.mrf.mxu0
        %957 = vmatprep.mubr.f32.mxu0 0.0
        %958 = vmatmul.mubr.f32.gmra.mxu0 %v865
        %v959 = vpop.f32.mrf.mxu0
        %v960 = vadd.f32 0.0, %v959
        %v961 = vpop.f32.mrf.mxu0
        %962 = vmatprep.mubr.f32.mxu0 0.0
        %963 = vmatmul.mubr.f32.gmra.mxu0 %v866
        %v964 = vpop.f32.mrf.mxu0
        %v965 = vadd.f32 0.0, %v964
        %v966 = vpop.f32.mrf.mxu0
        %967 = vmatprep.mubr.f32.mxu0 0.0
        %968 = vmatmul.mubr.f32.gmra.mxu0 %v867
        %v969 = vpop.f32.mrf.mxu0
        %v970 = vadd.f32 0.0, %v969
        %v971 = vpop.f32.mrf.mxu0
        %972 = vmatprep.mubr.f32.mxu0 0.0
        %973 = vmatmul.mubr.f32.gmra.mxu0 %v868
        %v974 = vpop.f32.mrf.mxu0
        %v975 = vadd.f32 0.0, %v974
        %v976 = vpop.f32.mrf.mxu0
        %977 = vmatprep.mubr.f32.mxu0 0.0
        %978 = vmatmul.mubr.f32.gmra.mxu0 %v869
        %v979 = vpop.f32.mrf.mxu0
        %v980 = vadd.f32 0.0, %v979
        %v981 = vpop.f32.mrf.mxu0
        %982 = vmatprep.mubr.f32.mxu0 0.0
        %983 = vmatmul.mubr.f32.gmra.mxu0 %v870
        %v984 = vpop.f32.mrf.mxu0
        %v985 = vadd.f32 0.0, %v984
        %v986 = vpop.f32.mrf.mxu0
        %987 = vmatprep.mubr.f32.mxu0 0.0
        %988 = vmatmul.mubr.f32.gmra.mxu0 %v871
        %v989 = vpop.f32.mrf.mxu0
        %v990 = vadd.f32 0.0, %v989
        %v991 = vpop.f32.mrf.mxu0
        %992 = vmatprep.mubr.f32.mxu0 0.0
        %993 = vmatmul.mubr.f32.gmra.mxu0 %v872
        %v994 = vpop.f32.mrf.mxu0
        %v995 = vadd.f32 0.0, %v994
        %v996 = vpop.f32.mrf.mxu0
        %997 = vmatprep.mubr.f32.mxu0 0.0
        %998 = vmatmul.mubr.f32.gmra.mxu0 %v873
        %v999 = vpop.f32.mrf.mxu0
        %v1000 = vadd.f32 0.0, %v999
        %v1001 = vpop.f32.mrf.mxu0
        %1002 = vmatprep.mubr.f32.mxu0 0.0
        %1003 = vmatmul.mubr.f32.gmra.mxu0 %v874
        %v1004 = vpop.f32.mrf.mxu0
        %v1005 = vadd.f32 0.0, %v1004
        %v1006 = vpop.f32.mrf.mxu0
        %1007 = vmatprep.mubr.f32.mxu0 0.0
        %1008 = vmatmul.mubr.f32.gmra.mxu0 %v875
        %v1009 = vpop.f32.mrf.mxu0
        %v1010 = vadd.f32 0.0, %v1009
        %v1011 = vpop.f32.mrf.mxu0
        %1012 = vmatprep.mubr.f32.mxu0 0.0
        %1013 = vmatmul.mubr.f32.gmra.mxu0 %v876
        %v1014 = vpop.f32.mrf.mxu0
        %v1015 = vadd.f32 0.0, %v1014
        %v1016 = vpop.f32.mrf.mxu0
        %1017 = vmatprep.mubr.f32.mxu0 0.0
        %1018 = vmatmul.mubr.f32.gmra.mxu0 %v877
        %v1019 = vpop.f32.mrf.mxu0
        %v1020 = vadd.f32 0.0, %v1019
        %v1021 = vpop.f32.mrf.mxu0
        %1022 = vdwg.mxu0
        %1023 = vadd.xlane.f32.xlu0 %v862
        %v1024 = vpop.xlane.xlu0 %1023
        %1025 = vadd.xlane.f32.xlu0 %v863
        %v1026 = vpop.xlane.xlu0 %1025
        %1027 = vadd.xlane.f32.xlu0 %v864
        %v1028 = vpop.xlane.xlu0 %1027
        %1029 = vadd.xlane.f32.xlu0 %v865
        %v1030 = vpop.xlane.xlu0 %1029
        %1031 = vadd.xlane.f32.xlu0 %v866
        %v1032 = vpop.xlane.xlu0 %1031
        %1033 = vadd.xlane.f32.xlu0 %v867
        %v1034 = vpop.xlane.xlu0 %1033
        %1035 = vadd.xlane.f32.xlu0 %v868
        %v1036 = vpop.xlane.xlu0 %1035
        %1037 = vadd.xlane.f32.xlu0 %v869
        %v1038 = vpop.xlane.xlu0 %1037
        %1039 = vadd.xlane.f32.xlu0 %v870
        %v1040 = vpop.xlane.xlu0 %1039
        %1041 = vadd.xlane.f32.xlu0 %v871
        %v1042 = vpop.xlane.xlu0 %1041
        %1043 = vadd.xlane.f32.xlu0 %v872
        %v1044 = vpop.xlane.xlu0 %1043
        %1045 = vadd.xlane.f32.xlu0 %v873
        %v1046 = vpop.xlane.xlu0 %1045
        %1047 = vadd.xlane.f32.xlu0 %v874
        %v1048 = vpop.xlane.xlu0 %1047
        %1049 = vadd.xlane.f32.xlu0 %v875
        %v1050 = vpop.xlane.xlu0 %1049
        %1051 = vadd.xlane.f32.xlu0 %v876
        %v1052 = vpop.xlane.xlu0 %1051
        %1053 = vadd.xlane.f32.xlu0 %v877
        %v1054 = vpop.xlane.xlu0 %1053
        %v1055 = vmax.f32 %v1024, 1.0
        %v1056 = vmax.f32 %v1026, 1.0
        %v1057 = vmax.f32 %v1028, 1.0
        %v1058 = vmax.f32 %v1030, 1.0
        %v1059 = vmax.f32 %v1032, 1.0
        %v1060 = vmax.f32 %v1034, 1.0
        %v1061 = vmax.f32 %v1036, 1.0
        %v1062 = vmax.f32 %v1038, 1.0
        %v1063 = vmax.f32 %v1040, 1.0
        %v1064 = vmax.f32 %v1042, 1.0
        %v1065 = vmax.f32 %v1044, 1.0
        %v1066 = vmax.f32 %v1046, 1.0
        %v1067 = vmax.f32 %v1048, 1.0
        %v1068 = vmax.f32 %v1050, 1.0
        %v1069 = vmax.f32 %v1052, 1.0
        %v1070 = vmax.f32 %v1054, 1.0
        %v1071 = vrcp.pop %v1055
        %v1072 = vmul.f32 1.0, %v1071
        %v1073 = vrcp.pop %v1056
        %v1074 = vmul.f32 1.0, %v1073
        %v1075 = vrcp.pop %v1057
        %v1076 = vmul.f32 1.0, %v1075
        %v1077 = vrcp.pop %v1058
        %v1078 = vmul.f32 1.0, %v1077
        %v1079 = vrcp.pop %v1059
        %v1080 = vmul.f32 1.0, %v1079
        %v1081 = vrcp.pop %v1060
        %v1082 = vmul.f32 1.0, %v1081
        %v1083 = vrcp.pop %v1061
        %v1084 = vmul.f32 1.0, %v1083
        %v1085 = vrcp.pop %v1062
        %v1086 = vmul.f32 1.0, %v1085
        %v1087 = vrcp.pop %v1063
        %v1088 = vmul.f32 1.0, %v1087
        %v1089 = vrcp.pop %v1064
        %v1090 = vmul.f32 1.0, %v1089
        %v1091 = vrcp.pop %v1065
        %v1092 = vmul.f32 1.0, %v1091
        %v1093 = vrcp.pop %v1066
        %v1094 = vmul.f32 1.0, %v1093
        %v1095 = vrcp.pop %v1067
        %v1096 = vmul.f32 1.0, %v1095
        %v1097 = vrcp.pop %v1068
        %v1098 = vmul.f32 1.0, %v1097
        %v1099 = vrcp.pop %v1069
        %v1100 = vmul.f32 1.0, %v1099
        %v1101 = vrcp.pop %v1070
        %v1102 = vmul.f32 1.0, %v1101
        %v1103 = vmul.f32 %v945, %v1072
        %v1104 = vmul.f32 %v950, %v1074
        %v1105 = vmul.f32 %v955, %v1076
        %v1106 = vmul.f32 %v960, %v1078
        %v1107 = vmul.f32 %v965, %v1080
        %v1108 = vmul.f32 %v970, %v1082
        %v1109 = vmul.f32 %v975, %v1084
        %v1110 = vmul.f32 %v980, %v1086
        %v1111 = vmul.f32 %v985, %v1088
        %v1112 = vmul.f32 %v990, %v1090
        %v1113 = vmul.f32 %v995, %v1092
        %v1114 = vmul.f32 %v1000, %v1094
        %v1115 = vmul.f32 %v1005, %v1096
        %v1116 = vmul.f32 %v1010, %v1098
        %v1117 = vmul.f32 %v1015, %v1100
        %v1118 = vmul.f32 %v1020, %v1102
        %1119 = vst [vmem:[#allocation2 + $0x8] sm:$0xff] %v1103
        %1120 = vst [vmem:[#allocation2 + $0x20] sm:$0xff] %v1104
        %1121 = vst [vmem:[#allocation2 + $0x38] sm:$0xff] %v1105
        %1122 = vst [vmem:[#allocation2 + $0x50] sm:$0xff] %v1106
        %1123 = vst [vmem:[#allocation2 + $0x68] sm:$0xff] %v1107
        %1124 = vst [vmem:[#allocation2 + $0x80] sm:$0xff] %v1108
        %1125 = vst [vmem:[#allocation2 + $0x98] sm:$0xff] %v1109
        %1126 = vst [vmem:[#allocation2 + $0xb0] sm:$0xff] %v1110
        %1127 = vst [vmem:[#allocation2 + $0xc8] sm:$0xff] %v1111
        %1128 = vst [vmem:[#allocation2 + $0xe0] sm:$0xff] %v1112
        %1129 = vst [vmem:[#allocation2 + $0xf8] sm:$0xff] %v1113
        %1130 = vst [vmem:[#allocation2 + $0x110] sm:$0xff] %v1114
        %1131 = vst [vmem:[#allocation2 + $0x128] sm:$0xff] %v1115
        %1132 = vst [vmem:[#allocation2 + $0x140] sm:$0xff] %v1116
        %1133 = vst [vmem:[#allocation2 + $0x158] sm:$0xff] %v1117
        %1134 = vst [vmem:[#allocation2 + $0x170] sm:$0xff] %v1118
        %s1135 = scalar_lea.vmem %s292, 128 [#allocation8]
        %v1136 = vld [vmem:[%s1135] sm:$0xf]
        %v1137 = vld [vmem:[%s1135 + $0x4] sm:$0xf]
        %v1138 = vld [vmem:[%s1135 + $0x8] sm:$0xf]
        %v1139 = vld [vmem:[%s1135 + $0xc] sm:$0xf]
        %v1140 = vld [vmem:[%s1135 + $0x10] sm:$0xf]
        %v1141 = vld [vmem:[%s1135 + $0x14] sm:$0xf]
        %v1142 = vld [vmem:[%s1135 + $0x18] sm:$0xf]
        %v1143 = vld [vmem:[%s1135 + $0x1c] sm:$0xf]
        %v1144 = vld [vmem:[%s1135 + $0x20] sm:$0xf]
        %v1145 = vld [vmem:[%s1135 + $0x24] sm:$0xf]
        %v1146 = vld [vmem:[%s1135 + $0x28] sm:$0xf]
        %v1147 = vld [vmem:[%s1135 + $0x2c] sm:$0xf]
        %v1148 = vld [vmem:[%s1135 + $0x30] sm:$0xf]
        %v1149 = vld [vmem:[%s1135 + $0x34] sm:$0xf]
        %v1150 = vld [vmem:[%s1135 + $0x38] sm:$0xf]
        %v1151 = vld [vmem:[%s1135 + $0x3c] sm:$0xf]
        %v1152 = vunpack.c.l.bf16 %v1136
        %v1153 = vunpack.c.l.bf16 %v1137
        %v1154 = vunpack.c.l.bf16 %v1138
        %v1155 = vunpack.c.l.bf16 %v1139
        %v1156 = vunpack.c.l.bf16 %v1140
        %v1157 = vunpack.c.l.bf16 %v1141
        %v1158 = vunpack.c.l.bf16 %v1142
        %v1159 = vunpack.c.l.bf16 %v1143
        %v1160 = vunpack.c.l.bf16 %v1144
        %v1161 = vunpack.c.l.bf16 %v1145
        %v1162 = vunpack.c.l.bf16 %v1146
        %v1163 = vunpack.c.l.bf16 %v1147
        %v1164 = vunpack.c.l.bf16 %v1148
        %v1165 = vunpack.c.l.bf16 %v1149
        %v1166 = vunpack.c.l.bf16 %v1150
        %v1167 = vunpack.c.l.bf16 %v1151
        %1168 = vmatprep.subr.mxu0 0.0
        %1169 = vmatpush1.msra.mxu0 %v555
        %1170 = vmatprep.subr.mxu0 0.0
        %1171 = vmatpush1.msra.mxu0 %v554
        %1172 = vmatprep.subr.mxu0 0.0
        %1173 = vmatpush1.msra.mxu0 %v553
        %1174 = vmatprep.subr.mxu0 0.0
        %1175 = vmatpush1.msra.mxu0 %v552
        %1176 = vmatprep.subr.mxu0 0.0
        %1177 = vmatpush1.msra.mxu0 %v551
        %1178 = vmatprep.subr.mxu0 0.0
        %1179 = vmatpush1.msra.mxu0 %v550
        %1180 = vmatprep.subr.mxu0 0.0
        %1181 = vmatpush1.msra.mxu0 %v549
        %1182 = vmatprep.subr.mxu0 0.0
        %1183 = vmatpush1.msra.mxu0 %v548
        %1184 = vmatprep.subr.mxu0 0.0
        %1185 = vmatpush1.msra.mxu0 %v547
        %1186 = vmatprep.subr.mxu0 0.0
        %1187 = vmatpush1.msra.mxu0 %v546
        %1188 = vmatprep.subr.mxu0 0.0
        %1189 = vmatpush1.msra.mxu0 %v545
        %1190 = vmatprep.subr.mxu0 0.0
        %1191 = vmatpush1.msra.mxu0 %v544
        %1192 = vmatprep.subr.mxu0 0.0
        %1193 = vmatpush1.msra.mxu0 %v543
        %1194 = vmatprep.subr.mxu0 0.0
        %1195 = vmatpush1.msra.mxu0 %v542
        %1196 = vmatprep.subr.mxu0 0.0
        %1197 = vmatpush1.msra.mxu0 %v541
        %1198 = vmatprep.subr.mxu0 0.0
        %1199 = vmatpush1.msra.mxu0 %v540
        %1200 = vmatprep.subr.mxu0 0.0
        %1201 = vmatpush2.msra.mxu0 0.0
        %1202 = vmatprep.subr.mxu0 0.0
        %1203 = vmatpush2.msra.mxu0 0.0
        %1204 = vmatprep.subr.mxu0 0.0
        %1205 = vmatpush2.msra.mxu0 0.0
        %1206 = vmatprep.subr.mxu0 0.0
        %1207 = vmatpush2.msra.mxu0 0.0
        %1208 = vmatprep.subr.mxu0 0.0
        %1209 = vmatpush2.msra.mxu0 0.0
        %1210 = vmatprep.subr.mxu0 0.0
        %1211 = vmatpush2.msra.mxu0 0.0
        %1212 = vmatprep.subr.mxu0 0.0
        %1213 = vmatpush2.msra.mxu0 0.0
        %1214 = vmatprep.subr.mxu0 0.0
        %1215 = vmatpush2.msra.mxu0 0.0
        %1216 = vmatprep.subr.mxu0 0.0
        %1217 = vmatpush2.msra.mxu0 0.0
        %1218 = vmatprep.subr.mxu0 0.0
        %1219 = vmatpush2.msra.mxu0 0.0
        %1220 = vmatprep.subr.mxu0 0.0
        %1221 = vmatpush2.msra.mxu0 0.0
        %1222 = vmatprep.subr.mxu0 0.0
        %1223 = vmatpush2.msra.mxu0 0.0
        %1224 = vmatprep.subr.mxu0 0.0
        %1225 = vmatpush2.msra.mxu0 0.0
        %1226 = vmatprep.subr.mxu0 0.0
        %1227 = vmatpush2.msra.mxu0 0.0
        %1228 = vmatprep.subr.mxu0 0.0
        %1229 = vmatpush2.msra.mxu0 0.0
        %1230 = vmatprep.subr.mxu0 0.0
        %1231 = vmatpush2.msra.mxu0 0.0
        %1232 = vmatprep.mubr.f32.mxu0 0.0
        %1233 = vmatmul.mubr.f32.gmra.mxu0 %v1152
        %v1234 = vpop.f32.mrf.mxu0
        %v1235 = vadd.f32 0.0, %v1234
        %v1236 = vpop.f32.mrf.mxu0
        %1237 = vmatprep.mubr.f32.mxu0 0.0
        %1238 = vmatmul.mubr.f32.gmra.mxu0 %v1153
        %v1239 = vpop.f32.mrf.mxu0
        %v1240 = vadd.f32 0.0, %v1239
        %v1241 = vpop.f32.mrf.mxu0
        %1242 = vmatprep.mubr.f32.mxu0 0.0
        %1243 = vmatmul.mubr.f32.gmra.mxu0 %v1154
        %v1244 = vpop.f32.mrf.mxu0
        %v1245 = vadd.f32 0.0, %v1244
        %v1246 = vpop.f32.mrf.mxu0
        %1247 = vmatprep.mubr.f32.mxu0 0.0
        %1248 = vmatmul.mubr.f32.gmra.mxu0 %v1155
        %v1249 = vpop.f32.mrf.mxu0
        %v1250 = vadd.f32 0.0, %v1249
        %v1251 = vpop.f32.mrf.mxu0
        %1252 = vmatprep.mubr.f32.mxu0 0.0
        %1253 = vmatmul.mubr.f32.gmra.mxu0 %v1156
        %v1254 = vpop.f32.mrf.mxu0
        %v1255 = vadd.f32 0.0, %v1254
        %v1256 = vpop.f32.mrf.mxu0
        %1257 = vmatprep.mubr.f32.mxu0 0.0
        %1258 = vmatmul.mubr.f32.gmra.mxu0 %v1157
        %v1259 = vpop.f32.mrf.mxu0
        %v1260 = vadd.f32 0.0, %v1259
        %v1261 = vpop.f32.mrf.mxu0
        %1262 = vmatprep.mubr.f32.mxu0 0.0
        %1263 = vmatmul.mubr.f32.gmra.mxu0 %v1158
        %v1264 = vpop.f32.mrf.mxu0
        %v1265 = vadd.f32 0.0, %v1264
        %v1266 = vpop.f32.mrf.mxu0
        %1267 = vmatprep.mubr.f32.mxu0 0.0
        %1268 = vmatmul.mubr.f32.gmra.mxu0 %v1159
        %v1269 = vpop.f32.mrf.mxu0
        %v1270 = vadd.f32 0.0, %v1269
        %v1271 = vpop.f32.mrf.mxu0
        %1272 = vmatprep.mubr.f32.mxu0 0.0
        %1273 = vmatmul.mubr.f32.gmra.mxu0 %v1160
        %v1274 = vpop.f32.mrf.mxu0
        %v1275 = vadd.f32 0.0, %v1274
        %v1276 = vpop.f32.mrf.mxu0
        %1277 = vmatprep.mubr.f32.mxu0 0.0
        %1278 = vmatmul.mubr.f32.gmra.mxu0 %v1161
        %v1279 = vpop.f32.mrf.mxu0
        %v1280 = vadd.f32 0.0, %v1279
        %v1281 = vpop.f32.mrf.mxu0
        %1282 = vmatprep.mubr.f32.mxu0 0.0
        %1283 = vmatmul.mubr.f32.gmra.mxu0 %v1162
        %v1284 = vpop.f32.mrf.mxu0
        %v1285 = vadd.f32 0.0, %v1284
        %v1286 = vpop.f32.mrf.mxu0
        %1287 = vmatprep.mubr.f32.mxu0 0.0
        %1288 = vmatmul.mubr.f32.gmra.mxu0 %v1163
        %v1289 = vpop.f32.mrf.mxu0
        %v1290 = vadd.f32 0.0, %v1289
        %v1291 = vpop.f32.mrf.mxu0
        %1292 = vmatprep.mubr.f32.mxu0 0.0
        %1293 = vmatmul.mubr.f32.gmra.mxu0 %v1164
        %v1294 = vpop.f32.mrf.mxu0
        %v1295 = vadd.f32 0.0, %v1294
        %v1296 = vpop.f32.mrf.mxu0
        %1297 = vmatprep.mubr.f32.mxu0 0.0
        %1298 = vmatmul.mubr.f32.gmra.mxu0 %v1165
        %v1299 = vpop.f32.mrf.mxu0
        %v1300 = vadd.f32 0.0, %v1299
        %v1301 = vpop.f32.mrf.mxu0
        %1302 = vmatprep.mubr.f32.mxu0 0.0
        %1303 = vmatmul.mubr.f32.gmra.mxu0 %v1166
        %v1304 = vpop.f32.mrf.mxu0
        %v1305 = vadd.f32 0.0, %v1304
        %v1306 = vpop.f32.mrf.mxu0
        %1307 = vmatprep.mubr.f32.mxu0 0.0
        %1308 = vmatmul.mubr.f32.gmra.mxu0 %v1167
        %v1309 = vpop.f32.mrf.mxu0
        %v1310 = vadd.f32 0.0, %v1309
        %v1311 = vpop.f32.mrf.mxu0
        %1312 = vdwg.mxu0
        %1313 = vadd.xlane.f32.xlu0 %v1152
        %v1314 = vpop.xlane.xlu0 %1313
        %1315 = vadd.xlane.f32.xlu0 %v1153
        %v1316 = vpop.xlane.xlu0 %1315
        %1317 = vadd.xlane.f32.xlu0 %v1154
        %v1318 = vpop.xlane.xlu0 %1317
        %1319 = vadd.xlane.f32.xlu0 %v1155
        %v1320 = vpop.xlane.xlu0 %1319
        %1321 = vadd.xlane.f32.xlu0 %v1156
        %v1322 = vpop.xlane.xlu0 %1321
        %1323 = vadd.xlane.f32.xlu0 %v1157
        %v1324 = vpop.xlane.xlu0 %1323
        %1325 = vadd.xlane.f32.xlu0 %v1158
        %v1326 = vpop.xlane.xlu0 %1325
        %1327 = vadd.xlane.f32.xlu0 %v1159
        %v1328 = vpop.xlane.xlu0 %1327
        %1329 = vadd.xlane.f32.xlu0 %v1160
        %v1330 = vpop.xlane.xlu0 %1329
        %1331 = vadd.xlane.f32.xlu0 %v1161
        %v1332 = vpop.xlane.xlu0 %1331
        %1333 = vadd.xlane.f32.xlu0 %v1162
        %v1334 = vpop.xlane.xlu0 %1333
        %1335 = vadd.xlane.f32.xlu0 %v1163
        %v1336 = vpop.xlane.xlu0 %1335
        %1337 = vadd.xlane.f32.xlu0 %v1164
        %v1338 = vpop.xlane.xlu0 %1337
        %1339 = vadd.xlane.f32.xlu0 %v1165
        %v1340 = vpop.xlane.xlu0 %1339
        %1341 = vadd.xlane.f32.xlu0 %v1166
        %v1342 = vpop.xlane.xlu0 %1341
        %1343 = vadd.xlane.f32.xlu0 %v1167
        %v1344 = vpop.xlane.xlu0 %1343
        %v1345 = vmax.f32 %v1314, 1.0
        %v1346 = vmax.f32 %v1316, 1.0
        %v1347 = vmax.f32 %v1318, 1.0
        %v1348 = vmax.f32 %v1320, 1.0
        %v1349 = vmax.f32 %v1322, 1.0
        %v1350 = vmax.f32 %v1324, 1.0
        %v1351 = vmax.f32 %v1326, 1.0
        %v1352 = vmax.f32 %v1328, 1.0
        %v1353 = vmax.f32 %v1330, 1.0
        %v1354 = vmax.f32 %v1332, 1.0
        %v1355 = vmax.f32 %v1334, 1.0
        %v1356 = vmax.f32 %v1336, 1.0
        %v1357 = vmax.f32 %v1338, 1.0
        %v1358 = vmax.f32 %v1340, 1.0
        %v1359 = vmax.f32 %v1342, 1.0
        %v1360 = vmax.f32 %v1344, 1.0
        %v1361 = vrcp.pop %v1345
        %v1362 = vmul.f32 1.0, %v1361
        %v1363 = vrcp.pop %v1346
        %v1364 = vmul.f32 1.0, %v1363
        %v1365 = vrcp.pop %v1347
        %v1366 = vmul.f32 1.0, %v1365
        %v1367 = vrcp.pop %v1348
        %v1368 = vmul.f32 1.0, %v1367
        %v1369 = vrcp.pop %v1349
        %v1370 = vmul.f32 1.0, %v1369
        %v1371 = vrcp.pop %v1350
        %v1372 = vmul.f32 1.0, %v1371
        %v1373 = vrcp.pop %v1351
        %v1374 = vmul.f32 1.0, %v1373
        %v1375 = vrcp.pop %v1352
        %v1376 = vmul.f32 1.0, %v1375
        %v1377 = vrcp.pop %v1353
        %v1378 = vmul.f32 1.0, %v1377
        %v1379 = vrcp.pop %v1354
        %v1380 = vmul.f32 1.0, %v1379
        %v1381 = vrcp.pop %v1355
        %v1382 = vmul.f32 1.0, %v1381
        %v1383 = vrcp.pop %v1356
        %v1384 = vmul.f32 1.0, %v1383
        %v1385 = vrcp.pop %v1357
        %v1386 = vmul.f32 1.0, %v1385
        %v1387 = vrcp.pop %v1358
        %v1388 = vmul.f32 1.0, %v1387
        %v1389 = vrcp.pop %v1359
        %v1390 = vmul.f32 1.0, %v1389
        %v1391 = vrcp.pop %v1360
        %v1392 = vmul.f32 1.0, %v1391
        %v1393 = vmul.f32 %v1235, %v1362
        %v1394 = vmul.f32 %v1240, %v1364
        %v1395 = vmul.f32 %v1245, %v1366
        %v1396 = vmul.f32 %v1250, %v1368
        %v1397 = vmul.f32 %v1255, %v1370
        %v1398 = vmul.f32 %v1260, %v1372
        %v1399 = vmul.f32 %v1265, %v1374
        %v1400 = vmul.f32 %v1270, %v1376
        %v1401 = vmul.f32 %v1275, %v1378
        %v1402 = vmul.f32 %v1280, %v1380
        %v1403 = vmul.f32 %v1285, %v1382
        %v1404 = vmul.f32 %v1290, %v1384
        %v1405 = vmul.f32 %v1295, %v1386
        %v1406 = vmul.f32 %v1300, %v1388
        %v1407 = vmul.f32 %v1305, %v1390
        %v1408 = vmul.f32 %v1310, %v1392
        %1409 = vst [vmem:[#allocation2 + $0x10] sm:$0xff] %v1393
        %1410 = vst [vmem:[#allocation2 + $0x28] sm:$0xff] %v1394
        %1411 = vst [vmem:[#allocation2 + $0x40] sm:$0xff] %v1395
        %1412 = vst [vmem:[#allocation2 + $0x58] sm:$0xff] %v1396
        %1413 = vst [vmem:[#allocation2 + $0x70] sm:$0xff] %v1397
        %1414 = vst [vmem:[#allocation2 + $0x88] sm:$0xff] %v1398
        %1415 = vst [vmem:[#allocation2 + $0xa0] sm:$0xff] %v1399
        %1416 = vst [vmem:[#allocation2 + $0xb8] sm:$0xff] %v1400
        %1417 = vst [vmem:[#allocation2 + $0xd0] sm:$0xff] %v1401
        %1418 = vst [vmem:[#allocation2 + $0xe8] sm:$0xff] %v1402
        %1419 = vst [vmem:[#allocation2 + $0x100] sm:$0xff] %v1403
        %1420 = vst [vmem:[#allocation2 + $0x118] sm:$0xff] %v1404
        %1421 = vst [vmem:[#allocation2 + $0x130] sm:$0xff] %v1405
        %1422 = vst [vmem:[#allocation2 + $0x148] sm:$0xff] %v1406
        %1423 = vst [vmem:[#allocation2 + $0x160] sm:$0xff] %v1407
        %1424 = vst [vmem:[#allocation2 + $0x178] sm:$0xff] %v1408
        %v1425 = vld [vmem:[#allocation2] sm:$0xff]
        %v1426 = vld [vmem:[#allocation2 + $0x8] sm:$0xff]
        %v1427 = vld [vmem:[#allocation2 + $0x10] sm:$0xff]
        %v1428 = vld [vmem:[#allocation2 + $0x18] sm:$0xff]
        %v1429 = vld [vmem:[#allocation2 + $0x20] sm:$0xff]
        %v1430 = vld [vmem:[#allocation2 + $0x28] sm:$0xff]
        %v1431 = vld [vmem:[#allocation2 + $0x30] sm:$0xff]
        %v1432 = vld [vmem:[#allocation2 + $0x38] sm:$0xff]
        %v1433 = vld [vmem:[#allocation2 + $0x40] sm:$0xff]
        %v1434 = vld [vmem:[#allocation2 + $0x48] sm:$0xff]
        %v1435 = vld [vmem:[#allocation2 + $0x50] sm:$0xff]
        %v1436 = vld [vmem:[#allocation2 + $0x58] sm:$0xff]
        %v1437 = vld [vmem:[#allocation2 + $0x60] sm:$0xff]
        %v1438 = vld [vmem:[#allocation2 + $0x68] sm:$0xff]
        %v1439 = vld [vmem:[#allocation2 + $0x70] sm:$0xff]
        %v1440 = vld [vmem:[#allocation2 + $0x78] sm:$0xff]
        %v1441 = vld [vmem:[#allocation2 + $0x80] sm:$0xff]
        %v1442 = vld [vmem:[#allocation2 + $0x88] sm:$0xff]
        %v1443 = vld [vmem:[#allocation2 + $0x90] sm:$0xff]
        %v1444 = vld [vmem:[#allocation2 + $0x98] sm:$0xff]
        %v1445 = vld [vmem:[#allocation2 + $0xa0] sm:$0xff]
        %v1446 = vld [vmem:[#allocation2 + $0xa8] sm:$0xff]
        %v1447 = vld [vmem:[#allocation2 + $0xb0] sm:$0xff]
        %v1448 = vld [vmem:[#allocation2 + $0xb8] sm:$0xff]
        %v1449 = vld [vmem:[#allocation2 + $0xc0] sm:$0xff]
        %v1450 = vld [vmem:[#allocation2 + $0xc8] sm:$0xff]
        %v1451 = vld [vmem:[#allocation2 + $0xd0] sm:$0xff]
        %v1452 = vld [vmem:[#allocation2 + $0xd8] sm:$0xff]
        %v1453 = vld [vmem:[#allocation2 + $0xe0] sm:$0xff]
        %v1454 = vld [vmem:[#allocation2 + $0xe8] sm:$0xff]
        %v1455 = vld [vmem:[#allocation2 + $0xf0] sm:$0xff]
        %v1456 = vld [vmem:[#allocation2 + $0xf8] sm:$0xff]
        %v1457 = vld [vmem:[#allocation2 + $0x100] sm:$0xff]
        %v1458 = vld [vmem:[#allocation2 + $0x108] sm:$0xff]
        %v1459 = vld [vmem:[#allocation2 + $0x110] sm:$0xff]
        %v1460 = vld [vmem:[#allocation2 + $0x118] sm:$0xff]
        %v1461 = vld [vmem:[#allocation2 + $0x120] sm:$0xff]
        %v1462 = vld [vmem:[#allocation2 + $0x128] sm:$0xff]
        %v1463 = vld [vmem:[#allocation2 + $0x130] sm:$0xff]
        %v1464 = vld [vmem:[#allocation2 + $0x138] sm:$0xff]
        %v1465 = vld [vmem:[#allocation2 + $0x140] sm:$0xff]
        %v1466 = vld [vmem:[#allocation2 + $0x148] sm:$0xff]
        %v1467 = vld [vmem:[#allocation2 + $0x150] sm:$0xff]
        %v1468 = vld [vmem:[#allocation2 + $0x158] sm:$0xff]
        %v1469 = vld [vmem:[#allocation2 + $0x160] sm:$0xff]
        %v1470 = vld [vmem:[#allocation2 + $0x168] sm:$0xff]
        %v1471 = vld [vmem:[#allocation2 + $0x170] sm:$0xff]
        %v1472 = vld [vmem:[#allocation2 + $0x178] sm:$0xff]
        %v1473 = vld [vmem:[%s301] sm:$0xff]
        %v1474 = vld [vmem:[%s301 + $0x8] sm:$0xff]
        %v1475 = vld [vmem:[%s301 + $0x10] sm:$0xff]
        %v1476 = vld [vmem:[%s301 + $0x18] sm:$0xff]
        %v1477 = vld [vmem:[%s301 + $0x20] sm:$0xff]
        %v1478 = vld [vmem:[%s301 + $0x28] sm:$0xff]
        %v1479 = vld [vmem:[%s301 + $0x30] sm:$0xff]
        %v1480 = vld [vmem:[%s301 + $0x38] sm:$0xff]
        %v1481 = vld [vmem:[%s301 + $0x40] sm:$0xff]
        %v1482 = vld [vmem:[%s301 + $0x48] sm:$0xff]
        %v1483 = vld [vmem:[%s301 + $0x50] sm:$0xff]
        %v1484 = vld [vmem:[%s301 + $0x58] sm:$0xff]
        %v1485 = vld [vmem:[%s301 + $0x60] sm:$0xff]
        %v1486 = vld [vmem:[%s301 + $0x68] sm:$0xff]
        %v1487 = vld [vmem:[%s301 + $0x70] sm:$0xff]
        %v1488 = vld [vmem:[%s301 + $0x78] sm:$0xff]
        %v1489 = vld [vmem:[%s301 + $0x80] sm:$0xff]
        %v1490 = vld [vmem:[%s301 + $0x88] sm:$0xff]
        %v1491 = vld [vmem:[%s301 + $0x90] sm:$0xff]
        %v1492 = vld [vmem:[%s301 + $0x98] sm:$0xff]
        %v1493 = vld [vmem:[%s301 + $0xa0] sm:$0xff]
        %v1494 = vld [vmem:[%s301 + $0xa8] sm:$0xff]
        %v1495 = vld [vmem:[%s301 + $0xb0] sm:$0xff]
        %v1496 = vld [vmem:[%s301 + $0xb8] sm:$0xff]
        %v1497 = vld [vmem:[%s301 + $0xc0] sm:$0xff]
        %v1498 = vld [vmem:[%s301 + $0xc8] sm:$0xff]
        %v1499 = vld [vmem:[%s301 + $0xd0] sm:$0xff]
        %v1500 = vld [vmem:[%s301 + $0xd8] sm:$0xff]
        %v1501 = vld [vmem:[%s301 + $0xe0] sm:$0xff]
        %v1502 = vld [vmem:[%s301 + $0xe8] sm:$0xff]
        %v1503 = vld [vmem:[%s301 + $0xf0] sm:$0xff]
        %v1504 = vld [vmem:[%s301 + $0xf8] sm:$0xff]
        %v1505 = vld [vmem:[%s301 + $0x100] sm:$0xff]
        %v1506 = vld [vmem:[%s301 + $0x108] sm:$0xff]
        %v1507 = vld [vmem:[%s301 + $0x110] sm:$0xff]
        %v1508 = vld [vmem:[%s301 + $0x118] sm:$0xff]
        %v1509 = vld [vmem:[%s301 + $0x120] sm:$0xff]
        %v1510 = vld [vmem:[%s301 + $0x128] sm:$0xff]
        %v1511 = vld [vmem:[%s301 + $0x130] sm:$0xff]
        %v1512 = vld [vmem:[%s301 + $0x138] sm:$0xff]
        %v1513 = vld [vmem:[%s301 + $0x140] sm:$0xff]
        %v1514 = vld [vmem:[%s301 + $0x148] sm:$0xff]
        %v1515 = vld [vmem:[%s301 + $0x150] sm:$0xff]
        %v1516 = vld [vmem:[%s301 + $0x158] sm:$0xff]
        %v1517 = vld [vmem:[%s301 + $0x160] sm:$0xff]
        %v1518 = vld [vmem:[%s301 + $0x168] sm:$0xff]
        %v1519 = vld [vmem:[%s301 + $0x170] sm:$0xff]
        %v1520 = vld [vmem:[%s301 + $0x178] sm:$0xff]
        %v1521 = vld [vmem:[%s335] sm:$0x1]
        %v1523 = vlaneseq
        %v1524 = vshrl.u32 %v1523, 7
        %v1525 = vsub.s32 0, %v1524
        %v1526 = vrot.slane %v1521, %v1525
        %1528 = vmatprep.subr.mxu0 0.0
        %1529 = vmatpush1.msra.mxu0 %v1488
        %1530 = vmatprep.subr.mxu0 0.0
        %1531 = vmatpush1.msra.mxu0 %v1487
        %1532 = vmatprep.subr.mxu0 0.0
        %1533 = vmatpush1.msra.mxu0 %v1486
        %1534 = vmatprep.subr.mxu0 0.0
        %1535 = vmatpush1.msra.mxu0 %v1485
        %1536 = vmatprep.subr.mxu0 0.0
        %1537 = vmatpush1.msra.mxu0 %v1484
        %1538 = vmatprep.subr.mxu0 0.0
        %1539 = vmatpush1.msra.mxu0 %v1483
        %1540 = vmatprep.subr.mxu0 0.0
        %1541 = vmatpush1.msra.mxu0 %v1482
        %1542 = vmatprep.subr.mxu0 0.0
        %1543 = vmatpush1.msra.mxu0 %v1481
        %1544 = vmatprep.subr.mxu0 0.0
        %1545 = vmatpush1.msra.mxu0 %v1480
        %1546 = vmatprep.subr.mxu0 0.0
        %1547 = vmatpush1.msra.mxu0 %v1479
        %1548 = vmatprep.subr.mxu0 0.0
        %1549 = vmatpush1.msra.mxu0 %v1478
        %1550 = vmatprep.subr.mxu0 0.0
        %1551 = vmatpush1.msra.mxu0 %v1477
        %1552 = vmatprep.subr.mxu0 0.0
        %1553 = vmatpush1.msra.mxu0 %v1476
        %1554 = vmatprep.subr.mxu0 0.0
        %1555 = vmatpush1.msra.mxu0 %v1475
        %1556 = vmatprep.subr.mxu0 0.0
        %1557 = vmatpush1.msra.mxu0 %v1474
        %1558 = vmatprep.subr.mxu0 0.0
        %1559 = vmatpush1.msra.mxu0 %v1473
        %1560 = vmatprep.subr.mxu0 0.0
        %1561 = vmatpush2.msra.mxu0 %v1504
        %1562 = vmatprep.subr.mxu0 0.0
        %1563 = vmatpush2.msra.mxu0 %v1503
        %1564 = vmatprep.subr.mxu0 0.0
        %1565 = vmatpush2.msra.mxu0 %v1502
        %1566 = vmatprep.subr.mxu0 0.0
        %1567 = vmatpush2.msra.mxu0 %v1501
        %1568 = vmatprep.subr.mxu0 0.0
        %1569 = vmatpush2.msra.mxu0 %v1500
        %1570 = vmatprep.subr.mxu0 0.0
        %1571 = vmatpush2.msra.mxu0 %v1499
        %1572 = vmatprep.subr.mxu0 0.0
        %1573 = vmatpush2.msra.mxu0 %v1498
        %1574 = vmatprep.subr.mxu0 0.0
        %1575 = vmatpush2.msra.mxu0 %v1497
        %1576 = vmatprep.subr.mxu0 0.0
        %1577 = vmatpush2.msra.mxu0 %v1496
        %1578 = vmatprep.subr.mxu0 0.0
        %1579 = vmatpush2.msra.mxu0 %v1495
        %1580 = vmatprep.subr.mxu0 0.0
        %1581 = vmatpush2.msra.mxu0 %v1494
        %1582 = vmatprep.subr.mxu0 0.0
        %1583 = vmatpush2.msra.mxu0 %v1493
        %1584 = vmatprep.subr.mxu0 0.0
        %1585 = vmatpush2.msra.mxu0 %v1492
        %1586 = vmatprep.subr.mxu0 0.0
        %1587 = vmatpush2.msra.mxu0 %v1491
        %1588 = vmatprep.subr.mxu0 0.0
        %1589 = vmatpush2.msra.mxu0 %v1490
        %1590 = vmatprep.subr.mxu0 0.0
        %1591 = vmatpush2.msra.mxu0 %v1489
        %1592 = vmatprep.mubr.f32.mxu0 %v1426
        %1593 = vmatmul.mubr.f32.gmra.mxu0 %v1425
        %v1594 = vpop.f32.mrf.mxu0
        %v1595 = vadd.f32 %v1526, %v1594
        %v1596 = vpop.f32.mrf.mxu0
        %1597 = vmatprep.mubr.f32.mxu0 %v1429
        %1598 = vmatmul.mubr.f32.gmra.mxu0 %v1428
        %v1599 = vpop.f32.mrf.mxu0
        %v1600 = vadd.f32 %v1526, %v1599
        %v1601 = vpop.f32.mrf.mxu0
        %1602 = vmatprep.mubr.f32.mxu0 %v1432
        %1603 = vmatmul.mubr.f32.gmra.mxu0 %v1431
        %v1604 = vpop.f32.mrf.mxu0
        %v1605 = vadd.f32 %v1526, %v1604
        %v1606 = vpop.f32.mrf.mxu0
        %1607 = vmatprep.mubr.f32.mxu0 %v1435
        %1608 = vmatmul.mubr.f32.gmra.mxu0 %v1434
        %v1609 = vpop.f32.mrf.mxu0
        %v1610 = vadd.f32 %v1526, %v1609
        %v1611 = vpop.f32.mrf.mxu0
        %1612 = vmatprep.mubr.f32.mxu0 %v1438
        %1613 = vmatmul.mubr.f32.gmra.mxu0 %v1437
        %v1614 = vpop.f32.mrf.mxu0
        %v1615 = vadd.f32 %v1526, %v1614
        %v1616 = vpop.f32.mrf.mxu0
        %1617 = vmatprep.mubr.f32.mxu0 %v1441
        %1618 = vmatmul.mubr.f32.gmra.mxu0 %v1440
        %v1619 = vpop.f32.mrf.mxu0
        %v1620 = vadd.f32 %v1526, %v1619
        %v1621 = vpop.f32.mrf.mxu0
        %1622 = vmatprep.mubr.f32.mxu0 %v1444
        %1623 = vmatmul.mubr.f32.gmra.mxu0 %v1443
        %v1624 = vpop.f32.mrf.mxu0
        %v1625 = vadd.f32 %v1526, %v1624
        %v1626 = vpop.f32.mrf.mxu0
        %1627 = vmatprep.mubr.f32.mxu0 %v1447
        %1628 = vmatmul.mubr.f32.gmra.mxu0 %v1446
        %v1629 = vpop.f32.mrf.mxu0
        %v1630 = vadd.f32 %v1526, %v1629
        %v1631 = vpop.f32.mrf.mxu0
        %1632 = vmatprep.mubr.f32.mxu0 %v1450
        %1633 = vmatmul.mubr.f32.gmra.mxu0 %v1449
        %v1634 = vpop.f32.mrf.mxu0
        %v1635 = vadd.f32 %v1526, %v1634
        %v1636 = vpop.f32.mrf.mxu0
        %1637 = vmatprep.mubr.f32.mxu0 %v1453
        %1638 = vmatmul.mubr.f32.gmra.mxu0 %v1452
        %v1639 = vpop.f32.mrf.mxu0
        %v1640 = vadd.f32 %v1526, %v1639
        %v1641 = vpop.f32.mrf.mxu0
        %1642 = vmatprep.mubr.f32.mxu0 %v1456
        %1643 = vmatmul.mubr.f32.gmra.mxu0 %v1455
        %v1644 = vpop.f32.mrf.mxu0
        %v1645 = vadd.f32 %v1526, %v1644
        %v1646 = vpop.f32.mrf.mxu0
        %1647 = vmatprep.mubr.f32.mxu0 %v1459
        %1648 = vmatmul.mubr.f32.gmra.mxu0 %v1458
        %v1649 = vpop.f32.mrf.mxu0
        %v1650 = vadd.f32 %v1526, %v1649
        %v1651 = vpop.f32.mrf.mxu0
        %1652 = vmatprep.mubr.f32.mxu0 %v1462
        %1653 = vmatmul.mubr.f32.gmra.mxu0 %v1461
        %v1654 = vpop.f32.mrf.mxu0
        %v1655 = vadd.f32 %v1526, %v1654
        %v1656 = vpop.f32.mrf.mxu0
        %1657 = vmatprep.mubr.f32.mxu0 %v1465
        %1658 = vmatmul.mubr.f32.gmra.mxu0 %v1464
        %v1659 = vpop.f32.mrf.mxu0
        %v1660 = vadd.f32 %v1526, %v1659
        %v1661 = vpop.f32.mrf.mxu0
        %1662 = vmatprep.mubr.f32.mxu0 %v1468
        %1663 = vmatmul.mubr.f32.gmra.mxu0 %v1467
        %v1664 = vpop.f32.mrf.mxu0
        %v1665 = vadd.f32 %v1526, %v1664
        %v1666 = vpop.f32.mrf.mxu0
        %1667 = vmatprep.mubr.f32.mxu0 %v1471
        %1668 = vmatmul.mubr.f32.gmra.mxu0 %v1470
        %v1669 = vpop.f32.mrf.mxu0
        %v1670 = vadd.f32 %v1526, %v1669
        %v1671 = vpop.f32.mrf.mxu0
        %1672 = vdwg.mxu0
        %1673 = vmatprep.subr.mxu0 0.0
        %1674 = vmatpush1.msra.mxu0 %v1520
        %1675 = vmatprep.subr.mxu0 0.0
        %1676 = vmatpush1.msra.mxu0 %v1519
        %1677 = vmatprep.subr.mxu0 0.0
        %1678 = vmatpush1.msra.mxu0 %v1518
        %1679 = vmatprep.subr.mxu0 0.0
        %1680 = vmatpush1.msra.mxu0 %v1517
        %1681 = vmatprep.subr.mxu0 0.0
        %1682 = vmatpush1.msra.mxu0 %v1516
        %1683 = vmatprep.subr.mxu0 0.0
        %1684 = vmatpush1.msra.mxu0 %v1515
        %1685 = vmatprep.subr.mxu0 0.0
        %1686 = vmatpush1.msra.mxu0 %v1514
        %1687 = vmatprep.subr.mxu0 0.0
        %1688 = vmatpush1.msra.mxu0 %v1513
        %1689 = vmatprep.subr.mxu0 0.0
        %1690 = vmatpush1.msra.mxu0 %v1512
        %1691 = vmatprep.subr.mxu0 0.0
        %1692 = vmatpush1.msra.mxu0 %v1511
        %1693 = vmatprep.subr.mxu0 0.0
        %1694 = vmatpush1.msra.mxu0 %v1510
        %1695 = vmatprep.subr.mxu0 0.0
        %1696 = vmatpush1.msra.mxu0 %v1509
        %1697 = vmatprep.subr.mxu0 0.0
        %1698 = vmatpush1.msra.mxu0 %v1508
        %1699 = vmatprep.subr.mxu0 0.0
        %1700 = vmatpush1.msra.mxu0 %v1507
        %1701 = vmatprep.subr.mxu0 0.0
        %1702 = vmatpush1.msra.mxu0 %v1506
        %1703 = vmatprep.subr.mxu0 0.0
        %1704 = vmatpush1.msra.mxu0 %v1505
        %1705 = vmatprep.subr.mxu0 0.0
        %1706 = vmatpush2.msra.mxu0 0.0
        %1707 = vmatprep.subr.mxu0 0.0
        %1708 = vmatpush2.msra.mxu0 0.0
        %1709 = vmatprep.subr.mxu0 0.0
        %1710 = vmatpush2.msra.mxu0 0.0
        %1711 = vmatprep.subr.mxu0 0.0
        %1712 = vmatpush2.msra.mxu0 0.0
        %1713 = vmatprep.subr.mxu0 0.0
        %1714 = vmatpush2.msra.mxu0 0.0
        %1715 = vmatprep.subr.mxu0 0.0
        %1716 = vmatpush2.msra.mxu0 0.0
        %1717 = vmatprep.subr.mxu0 0.0
        %1718 = vmatpush2.msra.mxu0 0.0
        %1719 = vmatprep.subr.mxu0 0.0
        %1720 = vmatpush2.msra.mxu0 0.0
        %1721 = vmatprep.subr.mxu0 0.0
        %1722 = vmatpush2.msra.mxu0 0.0
        %1723 = vmatprep.subr.mxu0 0.0
        %1724 = vmatpush2.msra.mxu0 0.0
        %1725 = vmatprep.subr.mxu0 0.0
        %1726 = vmatpush2.msra.mxu0 0.0
        %1727 = vmatprep.subr.mxu0 0.0
        %1728 = vmatpush2.msra.mxu0 0.0
        %1729 = vmatprep.subr.mxu0 0.0
        %1730 = vmatpush2.msra.mxu0 0.0
        %1731 = vmatprep.subr.mxu0 0.0
        %1732 = vmatpush2.msra.mxu0 0.0
        %1733 = vmatprep.subr.mxu0 0.0
        %1734 = vmatpush2.msra.mxu0 0.0
        %1735 = vmatprep.subr.mxu0 0.0
        %1736 = vmatpush2.msra.mxu0 0.0
        %1737 = vmatprep.mubr.f32.mxu0 0.0
        %1738 = vmatmul.mubr.f32.gmra.mxu0 %v1427
        %v1739 = vpop.f32.mrf.mxu0
        %v1740 = vadd.f32 %v1595, %v1739
        %v1741 = vpop.f32.mrf.mxu0
        %1742 = vmatprep.mubr.f32.mxu0 0.0
        %1743 = vmatmul.mubr.f32.gmra.mxu0 %v1430
        %v1744 = vpop.f32.mrf.mxu0
        %v1745 = vadd.f32 %v1600, %v1744
        %v1746 = vpop.f32.mrf.mxu0
        %1747 = vmatprep.mubr.f32.mxu0 0.0
        %1748 = vmatmul.mubr.f32.gmra.mxu0 %v1433
        %v1749 = vpop.f32.mrf.mxu0
        %v1750 = vadd.f32 %v1605, %v1749
        %v1751 = vpop.f32.mrf.mxu0
        %1752 = vmatprep.mubr.f32.mxu0 0.0
        %1753 = vmatmul.mubr.f32.gmra.mxu0 %v1436
        %v1754 = vpop.f32.mrf.mxu0
        %v1755 = vadd.f32 %v1610, %v1754
        %v1756 = vpop.f32.mrf.mxu0
        %1757 = vmatprep.mubr.f32.mxu0 0.0
        %1758 = vmatmul.mubr.f32.gmra.mxu0 %v1439
        %v1759 = vpop.f32.mrf.mxu0
        %v1760 = vadd.f32 %v1615, %v1759
        %v1761 = vpop.f32.mrf.mxu0
        %1762 = vmatprep.mubr.f32.mxu0 0.0
        %1763 = vmatmul.mubr.f32.gmra.mxu0 %v1442
        %v1764 = vpop.f32.mrf.mxu0
        %v1765 = vadd.f32 %v1620, %v1764
        %v1766 = vpop.f32.mrf.mxu0
        %1767 = vmatprep.mubr.f32.mxu0 0.0
        %1768 = vmatmul.mubr.f32.gmra.mxu0 %v1445
        %v1769 = vpop.f32.mrf.mxu0
        %v1770 = vadd.f32 %v1625, %v1769
        %v1771 = vpop.f32.mrf.mxu0
        %1772 = vmatprep.mubr.f32.mxu0 0.0
        %1773 = vmatmul.mubr.f32.gmra.mxu0 %v1448
        %v1774 = vpop.f32.mrf.mxu0
        %v1775 = vadd.f32 %v1630, %v1774
        %v1776 = vpop.f32.mrf.mxu0
        %1777 = vmatprep.mubr.f32.mxu0 0.0
        %1778 = vmatmul.mubr.f32.gmra.mxu0 %v1451
        %v1779 = vpop.f32.mrf.mxu0
        %v1780 = vadd.f32 %v1635, %v1779
        %v1781 = vpop.f32.mrf.mxu0
        %1782 = vmatprep.mubr.f32.mxu0 0.0
        %1783 = vmatmul.mubr.f32.gmra.mxu0 %v1454
        %v1784 = vpop.f32.mrf.mxu0
        %v1785 = vadd.f32 %v1640, %v1784
        %v1786 = vpop.f32.mrf.mxu0
        %1787 = vmatprep.mubr.f32.mxu0 0.0
        %1788 = vmatmul.mubr.f32.gmra.mxu0 %v1457
        %v1789 = vpop.f32.mrf.mxu0
        %v1790 = vadd.f32 %v1645, %v1789
        %v1791 = vpop.f32.mrf.mxu0
        %1792 = vmatprep.mubr.f32.mxu0 0.0
        %1793 = vmatmul.mubr.f32.gmra.mxu0 %v1460
        %v1794 = vpop.f32.mrf.mxu0
        %v1795 = vadd.f32 %v1650, %v1794
        %v1796 = vpop.f32.mrf.mxu0
        %1797 = vmatprep.mubr.f32.mxu0 0.0
        %1798 = vmatmul.mubr.f32.gmra.mxu0 %v1463
        %v1799 = vpop.f32.mrf.mxu0
        %v1800 = vadd.f32 %v1655, %v1799
        %v1801 = vpop.f32.mrf.mxu0
        %1802 = vmatprep.mubr.f32.mxu0 0.0
        %1803 = vmatmul.mubr.f32.gmra.mxu0 %v1466
        %v1804 = vpop.f32.mrf.mxu0
        %v1805 = vadd.f32 %v1660, %v1804
        %v1806 = vpop.f32.mrf.mxu0
        %1807 = vmatprep.mubr.f32.mxu0 0.0
        %1808 = vmatmul.mubr.f32.gmra.mxu0 %v1469
        %v1809 = vpop.f32.mrf.mxu0
        %v1810 = vadd.f32 %v1665, %v1809
        %v1811 = vpop.f32.mrf.mxu0
        %1812 = vmatprep.mubr.f32.mxu0 0.0
        %1813 = vmatmul.mubr.f32.gmra.mxu0 %v1472
        %v1814 = vpop.f32.mrf.mxu0
        %v1815 = vadd.f32 %v1670, %v1814
        %v1816 = vpop.f32.mrf.mxu0
        %1817 = vdwg.mxu0
        %v1818 = vmax.f32 %v1740, 0.0
        %v1819 = vmax.f32 %v1745, 0.0
        %v1820 = vmax.f32 %v1750, 0.0
        %v1821 = vmax.f32 %v1755, 0.0
        %v1822 = vmax.f32 %v1760, 0.0
        %v1823 = vmax.f32 %v1765, 0.0
        %v1824 = vmax.f32 %v1770, 0.0
        %v1825 = vmax.f32 %v1775, 0.0
        %v1826 = vmax.f32 %v1780, 0.0
        %v1827 = vmax.f32 %v1785, 0.0
        %v1828 = vmax.f32 %v1790, 0.0
        %v1829 = vmax.f32 %v1795, 0.0
        %v1830 = vmax.f32 %v1800, 0.0
        %v1831 = vmax.f32 %v1805, 0.0
        %v1832 = vmax.f32 %v1810, 0.0
        %v1833 = vmax.f32 %v1815, 0.0
        %1834 = vst [vmem:[#allocation10] sm:$0xff] %v1818
        %1835 = vst [vmem:[#allocation10 + $0x8] sm:$0xff] %v1819
        %1836 = vst [vmem:[#allocation10 + $0x10] sm:$0xff] %v1820
        %1837 = vst [vmem:[#allocation10 + $0x18] sm:$0xff] %v1821
        %1838 = vst [vmem:[#allocation10 + $0x20] sm:$0xff] %v1822
        %1839 = vst [vmem:[#allocation10 + $0x28] sm:$0xff] %v1823
        %1840 = vst [vmem:[#allocation10 + $0x30] sm:$0xff] %v1824
        %1841 = vst [vmem:[#allocation10 + $0x38] sm:$0xff] %v1825
        %1842 = vst [vmem:[#allocation10 + $0x40] sm:$0xff] %v1826
        %1843 = vst [vmem:[#allocation10 + $0x48] sm:$0xff] %v1827
        %1844 = vst [vmem:[#allocation10 + $0x50] sm:$0xff] %v1828
        %1845 = vst [vmem:[#allocation10 + $0x58] sm:$0xff] %v1829
        %1846 = vst [vmem:[#allocation10 + $0x60] sm:$0xff] %v1830
        %1847 = vst [vmem:[#allocation10 + $0x68] sm:$0xff] %v1831
        %1848 = vst [vmem:[#allocation10 + $0x70] sm:$0xff] %v1832
        %1849 = vst [vmem:[#allocation10 + $0x78] sm:$0xff] %v1833
        // Predicated region
        $region65: #{tpu_custom_call.1} parent=43 // pred_check
          %p1850 = pneg %p174
        $region66: #{tpu_custom_call.1} parent=43 // pred_check_branch
          %1852 = sbr.rel (%p1850) target = $region68
        $region67: #{tpu_custom_call.1} parent=43 // pred_region
          %s1854 = ssub.s32 2048, 2048
          %1855 = vsyncadd [#allocation5], %s1854
          %s1856 = sshll.u32 [#allocation10], 4
          %s1857 = int_to_ptr.vmem [resolvable:$true] %s1856
          %1862 = dma.vmem_to_hbm [thread:$0]  %s1857, 2048, %s6, [#allocation5], 128, 128, 8
        $region68: #{tpu_custom_call.1} parent=43 // pred_fallthru
          _
        // Predicated region
        $region69: #{tpu_custom_call.1} parent=43 // pred_check
          %p1863 = pneg %p174
        $region70: #{tpu_custom_call.1} parent=43 // pred_check_branch
          %1865 = sbr.rel (%p1863) target = $region72
        $region71: #{tpu_custom_call.1} parent=43 // pred_region
          %1866 = dma.done [#allocation5], 2048
        $region72: #{tpu_custom_call.1} parent=43 // pred_fallthru
          _
      $region44: #{tpu_custom_call.1} parent=5 // pred_fallthru
        _
      %p1867 = scmp.le.s32.totalorder 2, %s15
      // Predicated region
      $region73: #{tpu_custom_call.1} parent=5 // pred_check
        %p1868 = pneg %p1867
      $region74: #{tpu_custom_call.1} parent=5 // pred_check_branch
        %1870 = sbr.rel (%p1868) target = $region76
      $region75: #{tpu_custom_call.1} parent=5 // pred_region
        %s1871 = ssub.s32 %s15, 2
      $region76: #{tpu_custom_call.1} parent=5 // pred_fallthru
        _
    $region6: #{tpu_custom_call.1} parent=1 // loop_footer
      %s19 = sadd.s32 1, %s15
    $region7: #{tpu_custom_call.1} parent=1 // loop_footer_branch
      %14 = sbr.rel target = $region3
    $region8: #{tpu_custom_call.1} parent=1 // loop_exit
      _
    %1872 = vsyncpa [#allocation4], 1
    %s1873 = scalar_lea.sflag [#allocation4], 1
    %1874 = vsyncpa %s1873, 1
    %1875 = vsyncpa [#allocation7], 1
    %1876 = vsyncpa [#allocation5], 1
    %s1877 = scalar_lea.sflag [#allocation5], 1
    %1878 = vsyncpa %s1877, 1

</llo_original>
